<compile_context>
chip_gen: v6e
topology: v6e:2x2x1
jax: 0.10.0
libtpu: 0.0.40
codegen_flags: <defaults>
</compile_context>

<pallas_src>
import functools

import jax
import jax.numpy as jnp
from jax.experimental import pallas as pl
from jax.experimental.pallas import tpu as pltpu

INPUT_SIZE = 784
HIDDEN_SIZE = 200
OUTPUT_SIZE = 10
OUT_PAD = 128  # lane-dense padded output width


def _mlp_kernel(x_ref, w1_ref, b1_ref, w2_ref, b2_ref, o_ref):
    # x_ref:  (TB, 784)   bf16
    # w1_ref: (784, 200)  bf16      b1_ref: (1, 200)  f32
    # w2_ref: (200, 128)  bf16      b2_ref: (1, 128)  f32 (-1e30 in pad cols)
    # o_ref:  (TB, 128)   f32
    x = x_ref[...]

    # l1: Linear(784 -> 200) + ReLU   (bf16 inputs, f32 accumulate)
    h = jnp.dot(x, w1_ref[...], preferred_element_type=jnp.float32) + b1_ref[...]
    h = jnp.maximum(h, 0.0)

    # l3: Linear(200 -> 10), padded to 128 lanes; pad columns get -1e30 bias.
    logits = (
        jnp.dot(h.astype(jnp.bfloat16), w2_ref[...],
                preferred_element_type=jnp.float32)
        + b2_ref[...]
    )

    # log_softmax over dim=1 (numerically stable). Pad columns contribute
    # exp(-1e30 - m) == 0, so the real columns are exact.
    m = jnp.max(logits, axis=-1, keepdims=True)
    shifted = logits - m
    lse = jnp.log(jnp.sum(jnp.exp(shifted), axis=-1, keepdims=True))
    o_ref[...] = shifted - lse


@functools.partial(jax.jit, static_argnames=("batch_tile",))
def network_forward(x, w1, b1, w2, b2, *, batch_tile=256):
    """x: (B, 784) f32; w1: (784, 200); b1: (1, 200); w2: (200, 10); b2: (1, 10)."""
    B, D = x.shape
    assert D == INPUT_SIZE
    assert batch_tile % 8 == 0, "batch_tile must be a multiple of 8 (sublane)"

    # Pad batch so the grid evenly tiles it (padded rows are discarded).
    num_tiles = pl.cdiv(B, batch_tile)
    padded_B = num_tiles * batch_tile
    if padded_B != B:
        x = jnp.pad(x, ((0, padded_B - B), (0, 0)))

    # bf16 matmul operands (f32 accumulate in-kernel); biases stay f32.
    x_bf = x.astype(jnp.bfloat16)
    w1_bf = w1.astype(jnp.bfloat16)

    # Lane-dense padded second layer: zero weights + -1e30 bias in pad columns.
    w2p = jnp.zeros((HIDDEN_SIZE, OUT_PAD), jnp.bfloat16)
    w2p = w2p.at[:, :OUTPUT_SIZE].set(w2.astype(jnp.bfloat16))
    b2p = jnp.full((1, OUT_PAD), -1e30, jnp.float32)
    b2p = b2p.at[:, :OUTPUT_SIZE].set(b2.astype(jnp.float32))

    grid = (num_tiles,)
    out = pl.pallas_call(
        _mlp_kernel,
        out_shape=jax.ShapeDtypeStruct((padded_B, OUT_PAD), jnp.float32),
        grid_spec=pltpu.PrefetchScalarGridSpec(
            num_scalar_prefetch=0,
            grid=grid,
            in_specs=[
                pl.BlockSpec((batch_tile, INPUT_SIZE), lambda i: (i, 0)),
                pl.BlockSpec((INPUT_SIZE, HIDDEN_SIZE), lambda i: (0, 0)),
                pl.BlockSpec((1, HIDDEN_SIZE), lambda i: (0, 0)),
                pl.BlockSpec((HIDDEN_SIZE, OUT_PAD), lambda i: (0, 0)),
                pl.BlockSpec((1, OUT_PAD), lambda i: (0, 0)),
            ],
            out_specs=pl.BlockSpec((batch_tile, OUT_PAD), lambda i: (i, 0)),
        ),
        compiler_params=pltpu.CompilerParams(
            dimension_semantics=("parallel",),
        ),
    )(x_bf, w1_bf, b1.astype(jnp.float32), w2p, b2p)

    # Drop batch padding and the lane padding of the output layer.
    return out[:B, :OUTPUT_SIZE]


def init_params(key):
    """Deterministic init mimicking PyTorch nn.Linear default (U(-1/sqrt(fan_in), ..))."""
    k1, k2, k3, k4 = jax.random.split(key, 4)
    bound1 = 1.0 / (INPUT_SIZE ** 0.5)
    bound2 = 1.0 / (HIDDEN_SIZE ** 0.5)
    # Stored as (in, out) = W.T relative to PyTorch's (out, in).
    w1 = jax.random.uniform(k1, (INPUT_SIZE, HIDDEN_SIZE), jnp.float32, -bound1, bound1)
    b1 = jax.random.uniform(k2, (1, HIDDEN_SIZE), jnp.float32, -bound1, bound1)
    w2 = jax.random.uniform(k3, (HIDDEN_SIZE, OUTPUT_SIZE), jnp.float32, -bound2, bound2)
    b2 = jax.random.uniform(k4, (1, OUTPUT_SIZE), jnp.float32, -bound2, bound2)
    return w1, b1, w2, b2


def reference_forward(x, w1, b1, w2, b2):
    """JAX reference using the same bf16-matmul / f32-accumulate numerics."""
    xb = x.astype(jnp.bfloat16)
    w1b = w1.astype(jnp.bfloat16)
    w2b = w2.astype(jnp.bfloat16)
    h = jnp.dot(xb, w1b, preferred_element_type=jnp.float32) + b1
    h = jnp.maximum(h, 0.0)
    logits = jnp.dot(h.astype(jnp.bfloat16), w2b, preferred_element_type=jnp.float32) + b2
    return jax.nn.log_softmax(logits, axis=1)


if __name__ == "__main__":
    key = jax.random.PRNGKey(0)
    kx, kp = jax.random.split(key)

    # batch=512 with batch_tile=256 -> grid of 2 "parallel" steps (feeds both
    # v7x TensorCores); well under v5e's 16 MiB scoped-VMEM default.
    batch = 512
    # Synthetic "MNIST pixels / 255.0"-like input in [0, 1).
    x = jax.random.uniform(kx, (batch, INPUT_SIZE), jnp.float32, 0.0, 1.0)
    w1, b1, w2, b2 = init_params(kp)

    out = network_forward(x, w1, b1, w2, b2, batch_tile=256)
    out = jax.block_until_ready(out)

    ref = reference_forward(x, w1, b1, w2, b2)
    assert out.shape == (batch, OUTPUT_SIZE)
    assert jnp.allclose(out, ref, atol=5e-3, rtol=5e-3), "mismatch vs JAX reference"
    assert bool(jnp.all(jnp.isfinite(out))), "non-finite values in output"

    print("KERNEL_OK")
</pallas_src>

<mosaic_0001>
module attributes {stable_mosaic.version = 11 : i64} {
  func.func @_mlp_kernel(%arg0: i32, %arg1: memref<256x784xbf16, #tpu.memory_space<vmem>>, %arg2: memref<784x200xbf16, #tpu.memory_space<vmem>>, %arg3: memref<1x200xf32, #tpu.memory_space<vmem>>, %arg4: memref<200x128xbf16, #tpu.memory_space<vmem>>, %arg5: memref<1x128xf32, #tpu.memory_space<vmem>>, %arg6: memref<256x128xf32, #tpu.memory_space<vmem>>) attributes {dimension_semantics = [#tpu.dimension_semantics<parallel>], iteration_bounds = array<i64: 2>, scalar_prefetch = 0 : i64, scratch_operands = 0 : i64, tpu.core_type = #tpu.core_type<tc>, window_params = [{transform_indices = @transform_0, window_bounds = array<i64: 256, 784>}, {pipeline_mode = #tpu.pipeline_mode<synchronous>, transform_indices = @transform_1, window_bounds = array<i64: 784, 200>}, {pipeline_mode = #tpu.pipeline_mode<synchronous>, transform_indices = @transform_2, window_bounds = array<i64: 1, 200>}, {pipeline_mode = #tpu.pipeline_mode<synchronous>, transform_indices = @transform_3, window_bounds = array<i64: 200, 128>}, {pipeline_mode = #tpu.pipeline_mode<synchronous>, transform_indices = @transform_4, window_bounds = array<i64: 1, 128>}, {transform_indices = @transform_5, window_bounds = array<i64: 256, 128>}]} {
    %c0 = arith.constant 0 : index
    %c0_0 = arith.constant 0 : index
    %0 = vector.load %arg1[%c0, %c0_0] : memref<256x784xbf16, #tpu.memory_space<vmem>>, vector<256x784xbf16>
    %c0_1 = arith.constant 0 : index
    %c0_2 = arith.constant 0 : index
    %1 = vector.load %arg2[%c0_1, %c0_2] : memref<784x200xbf16, #tpu.memory_space<vmem>>, vector<784x200xbf16>
    %cst = arith.constant dense<0.000000e+00> : vector<256x200xf32>
    %2 = tpu.matmul %0, %1, %cst {dimension_numbers = #tpu.dot_dimension_numbers<[1], [0], [0], [1], [0, 0, 1, 1], [], []>} : vector<256x784xbf16>, vector<784x200xbf16>, vector<256x200xf32> -> vector<256x200xf32>
    %c0_3 = arith.constant 0 : index
    %c0_4 = arith.constant 0 : index
    %3 = vector.load %arg3[%c0_3, %c0_4] : memref<1x200xf32, #tpu.memory_space<vmem>>, vector<1x200xf32>
    %4 = vector.broadcast %3 : vector<1x200xf32> to vector<256x200xf32>
    %5 = arith.addf %2, %4 : vector<256x200xf32>
    %cst_5 = arith.constant 0.000000e+00 : f32
    %6 = vector.broadcast %cst_5 : f32 to vector<256x200xf32>
    %7 = arith.maximumf %5, %6 : vector<256x200xf32>
    %8 = arith.truncf %7 : vector<256x200xf32> to vector<256x200xbf16>
    %c0_6 = arith.constant 0 : index
    %c0_7 = arith.constant 0 : index
    %9 = vector.load %arg4[%c0_6, %c0_7] : memref<200x128xbf16, #tpu.memory_space<vmem>>, vector<200x128xbf16>
    %cst_8 = arith.constant dense<0.000000e+00> : vector<256x128xf32>
    %10 = tpu.matmul %8, %9, %cst_8 {dimension_numbers = #tpu.dot_dimension_numbers<[1], [0], [0], [1], [0, 0, 1, 1], [], []>} : vector<256x200xbf16>, vector<200x128xbf16>, vector<256x128xf32> -> vector<256x128xf32>
    %c0_9 = arith.constant 0 : index
    %c0_10 = arith.constant 0 : index
    %11 = vector.load %arg5[%c0_9, %c0_10] : memref<1x128xf32, #tpu.memory_space<vmem>>, vector<1x128xf32>
    %12 = vector.broadcast %11 : vector<1x128xf32> to vector<256x128xf32>
    %13 = arith.addf %10, %12 : vector<256x128xf32>
    %cst_11 = arith.constant dense<0xFF800000> : vector<256xf32>
    %14 = vector.multi_reduction <maximumf>, %13, %cst_11 [1] : vector<256x128xf32> to vector<256xf32>
    %15 = vector.shape_cast %14 : vector<256xf32> to vector<256x1xf32>
    %16 = vector.broadcast %15 : vector<256x1xf32> to vector<256x128xf32>
    %17 = arith.subf %13, %16 : vector<256x128xf32>
    %18 = math.exp %17 : vector<256x128xf32>
    %cst_12 = arith.constant dense<0.000000e+00> : vector<256xf32>
    %19 = vector.multi_reduction <add>, %18, %cst_12 [1] : vector<256x128xf32> to vector<256xf32>
    %20 = vector.shape_cast %19 : vector<256xf32> to vector<256x1xf32>
    %21 = math.log %20 : vector<256x1xf32>
    %22 = vector.broadcast %21 : vector<256x1xf32> to vector<256x128xf32>
    %23 = arith.subf %17, %22 : vector<256x128xf32>
    %c0_13 = arith.constant 0 : index
    %c0_14 = arith.constant 0 : index
    %24 = vector.load %arg6[%c0_13, %c0_14] : memref<256x128xf32, #tpu.memory_space<vmem>>, vector<256x128xf32>
    tpu.vector_store %arg6[%c0_13, %c0_14], %23 {strides = array<i32>} : memref<256x128xf32, #tpu.memory_space<vmem>>, vector<256x128xf32>,
    return
  }
  func.func @transform_0(%arg0: i32) -> (i32, i32) {
    %c0_i32 = arith.constant 0 : i32
    %c0_i32_0 = arith.constant 0 : i32
    return %arg0, %c0_i32 : i32, i32
  }
  func.func @transform_1(%arg0: i32) -> (i32, i32) {
    %c0_i32 = arith.constant 0 : i32
    %c0_i32_0 = arith.constant 0 : i32
    %c0_i32_1 = arith.constant 0 : i32
    return %c0_i32, %c0_i32_0 : i32, i32
  }
  func.func @transform_2(%arg0: i32) -> (i32, i32) {
    %c0_i32 = arith.constant 0 : i32
    %c0_i32_0 = arith.constant 0 : i32
    %c0_i32_1 = arith.constant 0 : i32
    return %c0_i32, %c0_i32_0 : i32, i32
  }
  func.func @transform_3(%arg0: i32) -> (i32, i32) {
    %c0_i32 = arith.constant 0 : i32
    %c0_i32_0 = arith.constant 0 : i32
    %c0_i32_1 = arith.constant 0 : i32
    return %c0_i32, %c0_i32_0 : i32, i32
  }
  func.func @transform_4(%arg0: i32) -> (i32, i32) {
    %c0_i32 = arith.constant 0 : i32
    %c0_i32_0 = arith.constant 0 : i32
    %c0_i32_1 = arith.constant 0 : i32
    return %c0_i32, %c0_i32_0 : i32, i32
  }
  func.func @transform_5(%arg0: i32) -> (i32, i32) {
    %c0_i32 = arith.constant 0 : i32
    %c0_i32_0 = arith.constant 0 : i32
    return %arg0, %c0_i32 : i32, i32
  }
}

</mosaic_0001>

<llo_original>
// kernel: network_forward.1
$region0: #{network_forward.1}
  #allocation0 [shape = 'u32[]', space=smem, size = 0x4, offset = 0x4, fixed_abs, tag = 'smem constant byte address 0x4 - core index']
  #allocation1 [shape = 'u32[144,128]{1,0:T(1,128)}', space=vmem, size = 0x12000, scoped, tag = 'internal scratch']
  %s0 = inlined_call_operand.vmem [shape: bf16[512,784], index: 0, kind: input, shape index: {}]
  %s1 = inlined_call_operand.vmem [shape: bf16[784,200], index: 1, kind: input, shape index: {}]
  %s2 = inlined_call_operand.vmem [shape: f32[1,200], index: 2, kind: input, shape index: {}]
  %s3 = inlined_call_operand.vmem [shape: bf16[200,128], index: 3, kind: input, shape index: {}]
  %s4 = inlined_call_operand.vmem [shape: f32[1,128], index: 4, kind: input, shape index: {}]
  %s5 = inlined_call_operand.vmem [shape: f32[512,128], index: 5, kind: output, shape index: {}]
  %s6 = sld [smem:[#allocation0]]
  $region53: #{network_forward.1} parent=0
    _
  %s8 = ssub.s32 1, %s6
  %s9 = scalar_select 0, %s8, %s6
  loop: start=0, step=1, limit=4
  $region2: #{network_forward.1} parent=0 // loop_pre_header
    _
  $region3: #{network_forward.1} parent=0 // loop_header
    %s11 = sphi 0, %s15
    %p12 = scmp.ge.s32.totalorder %s11, 4
    %s21 = sphi 0, %s23
    %s24 = sphi 0, %s21
    %s25 = sphi 0, %s24
    %s41 = sphi 0, %s25
    %s45 = sphi 0, %s45
    %s47 = sphi 0, %s45
    %s48 = sphi 0, %s47
    %s62 = sphi 0, %s48
    %s66 = sphi 0, %s66
    %s68 = sphi 0, %s66
    %s69 = sphi 0, %s68
    %s83 = sphi 0, %s69
    %s87 = sphi 0, %s87
    %s89 = sphi 0, %s87
    %s90 = sphi 0, %s89
    %s104 = sphi 0, %s90
    %s108 = sphi 0, %s108
    %s110 = sphi 0, %s108
    %s111 = sphi 0, %s110
    %s125 = sphi 0, %s111
    %s131 = sphi 0, %s133
    %s134 = sphi 0, %s131
    %s135 = sphi 0, %s134
    %s151 = sphi 0, %s135
  $region4: #{network_forward.1} parent=0 // loop_header_branch
    %14 = sbr.rel (%p12) target = $region8
  $region5: #{network_forward.1} parent=0 // loop_body
    %s16 = ssub.s32 %s11, 1
    %s17 = ssub.s32 %s11, 2
    %s18 = sadd.s32 %s11, 1
    %s19 = ssub.s32 %s11, %s18
    %p20 = scmp.eq.s32.totalorder %s19, 0
    %s22 = sadd.s32 %s21, 1
    %s23 = scalar_select %p20, %s21, %s22
    %p26 = pneg %p20
    %p27 = scmp.eq.s32.totalorder %s11, 1
    %p28 = por %p26, %p27
    %p29 = scmp.ne.s32.totalorder %s21, %s24
    %p30 = scmp.eq.s32.totalorder %s11, 0
    %p31 = por %p29, %p30
    %p32 = scmp.ne.s32.totalorder %s21, %s24
    %p33 = scmp.eq.s32.totalorder %s16, 1
    %p34 = por %p32, %p33
    %p35 = scmp.ne.s32.totalorder %s24, %s25
    %p36 = scmp.eq.s32.totalorder %s16, 0
    %p37 = por %p35, %p36
    %p38 = scmp.ne.s32.totalorder %s24, %s25
    %p39 = scmp.eq.s32.totalorder %s17, 1
    %p40 = por %p38, %p39
    %p42 = scmp.ne.s32.totalorder %s25, %s41
    %p43 = scmp.eq.s32.totalorder %s17, 0
    %p44 = por %p42, %p43
    %s46 = sadd.s32 %s45, 1
    %p49 = scmp.eq.s32.totalorder %s11, 1
    %p50 = scmp.ne.s32.totalorder %s45, %s47
    %p51 = scmp.eq.s32.totalorder %s11, 0
    %p52 = por %p50, %p51
    %p53 = scmp.ne.s32.totalorder %s45, %s47
    %p54 = scmp.eq.s32.totalorder %s16, 1
    %p55 = por %p53, %p54
    %p56 = scmp.ne.s32.totalorder %s47, %s48
    %p57 = scmp.eq.s32.totalorder %s16, 0
    %p58 = por %p56, %p57
    %p59 = scmp.ne.s32.totalorder %s47, %s48
    %p60 = scmp.eq.s32.totalorder %s17, 1
    %p61 = por %p59, %p60
    %p63 = scmp.ne.s32.totalorder %s48, %s62
    %p64 = scmp.eq.s32.totalorder %s17, 0
    %p65 = por %p63, %p64
    %s67 = sadd.s32 %s66, 1
    %p70 = scmp.eq.s32.totalorder %s11, 1
    %p71 = scmp.ne.s32.totalorder %s66, %s68
    %p72 = scmp.eq.s32.totalorder %s11, 0
    %p73 = por %p71, %p72
    %p74 = scmp.ne.s32.totalorder %s66, %s68
    %p75 = scmp.eq.s32.totalorder %s16, 1
    %p76 = por %p74, %p75
    %p77 = scmp.ne.s32.totalorder %s68, %s69
    %p78 = scmp.eq.s32.totalorder %s16, 0
    %p79 = por %p77, %p78
    %p80 = scmp.ne.s32.totalorder %s68, %s69
    %p81 = scmp.eq.s32.totalorder %s17, 1
    %p82 = por %p80, %p81
    %p84 = scmp.ne.s32.totalorder %s69, %s83
    %p85 = scmp.eq.s32.totalorder %s17, 0
    %p86 = por %p84, %p85
    %s88 = sadd.s32 %s87, 1
    %p91 = scmp.eq.s32.totalorder %s11, 1
    %p92 = scmp.ne.s32.totalorder %s87, %s89
    %p93 = scmp.eq.s32.totalorder %s11, 0
    %p94 = por %p92, %p93
    %p95 = scmp.ne.s32.totalorder %s87, %s89
    %p96 = scmp.eq.s32.totalorder %s16, 1
    %p97 = por %p95, %p96
    %p98 = scmp.ne.s32.totalorder %s89, %s90
    %p99 = scmp.eq.s32.totalorder %s16, 0
    %p100 = por %p98, %p99
    %p101 = scmp.ne.s32.totalorder %s89, %s90
    %p102 = scmp.eq.s32.totalorder %s17, 1
    %p103 = por %p101, %p102
    %p105 = scmp.ne.s32.totalorder %s90, %s104
    %p106 = scmp.eq.s32.totalorder %s17, 0
    %p107 = por %p105, %p106
    %s109 = sadd.s32 %s108, 1
    %p112 = scmp.eq.s32.totalorder %s11, 1
    %p113 = scmp.ne.s32.totalorder %s108, %s110
    %p114 = scmp.eq.s32.totalorder %s11, 0
    %p115 = por %p113, %p114
    %p116 = scmp.ne.s32.totalorder %s108, %s110
    %p117 = scmp.eq.s32.totalorder %s16, 1
    %p118 = por %p116, %p117
    %p119 = scmp.ne.s32.totalorder %s110, %s111
    %p120 = scmp.eq.s32.totalorder %s16, 0
    %p121 = por %p119, %p120
    %p122 = scmp.ne.s32.totalorder %s110, %s111
    %p123 = scmp.eq.s32.totalorder %s17, 1
    %p124 = por %p122, %p123
    %p126 = scmp.ne.s32.totalorder %s111, %s125
    %p127 = scmp.eq.s32.totalorder %s17, 0
    %p128 = por %p126, %p127
    %s129 = ssub.s32 %s11, %s18
    %p130 = scmp.eq.s32.totalorder %s129, 0
    %s132 = sadd.s32 %s131, 1
    %s133 = scalar_select %p130, %s131, %s132
    %p136 = pneg %p130
    %p137 = scmp.eq.s32.totalorder %s11, 1
    %p138 = por %p136, %p137
    %p139 = scmp.ne.s32.totalorder %s131, %s134
    %p140 = scmp.eq.s32.totalorder %s11, 0
    %p141 = por %p139, %p140
    %p142 = scmp.ne.s32.totalorder %s131, %s134
    %p143 = scmp.eq.s32.totalorder %s16, 1
    %p144 = por %p142, %p143
    %p145 = scmp.ne.s32.totalorder %s134, %s135
    %p146 = scmp.eq.s32.totalorder %s16, 0
    %p147 = por %p145, %p146
    %p148 = scmp.ne.s32.totalorder %s134, %s135
    %p149 = scmp.eq.s32.totalorder %s17, 1
    %p150 = por %p148, %p149
    %p152 = scmp.ne.s32.totalorder %s135, %s151
    %p153 = scmp.eq.s32.totalorder %s17, 0
    %p154 = por %p152, %p153
    %p155 = scmp.le.s32.totalorder 1, %s11
    %p156 = scmp.lt.s32.totalorder %s11, 3
    %p157 = pnand %p155, %p156
    %p158 = pneg %p157
    // Predicated region
    $region9: #{network_forward.1} parent=5 // pred_check
      _
    $region10: #{network_forward.1} parent=5 // pred_check_branch
      %160 = sbr.rel (%p157) target = $region12
    $region11: #{network_forward.1} parent=5 // pred_region
      %s161 = ssub.s32 %s11, 1
      // Predicated region
      $region13: #{network_forward.1} parent=11 // pred_check
        %p162 = pneg %p58
      $region14: #{network_forward.1} parent=11 // pred_check_branch
        %164 = sbr.rel (%p162) target = $region16
      $region15: #{network_forward.1} parent=11 // pred_region
        _
      $region16: #{network_forward.1} parent=11 // pred_fallthru
        _
      // Predicated region
      $region17: #{network_forward.1} parent=11 // pred_check
        %p165 = pneg %p79
      $region18: #{network_forward.1} parent=11 // pred_check_branch
        %167 = sbr.rel (%p165) target = $region20
      $region19: #{network_forward.1} parent=11 // pred_region
        _
      $region20: #{network_forward.1} parent=11 // pred_fallthru
        _
      // Predicated region
      $region21: #{network_forward.1} parent=11 // pred_check
        %p168 = pneg %p100
      $region22: #{network_forward.1} parent=11 // pred_check_branch
        %170 = sbr.rel (%p168) target = $region24
      $region23: #{network_forward.1} parent=11 // pred_region
        _
      $region24: #{network_forward.1} parent=11 // pred_fallthru
        _
      // Predicated region
      $region25: #{network_forward.1} parent=11 // pred_check
        %p171 = pneg %p121
      $region26: #{network_forward.1} parent=11 // pred_check_branch
        %173 = sbr.rel (%p171) target = $region28
      $region27: #{network_forward.1} parent=11 // pred_region
        _
      $region28: #{network_forward.1} parent=11 // pred_fallthru
        _
    $region12: #{network_forward.1} parent=5 // pred_fallthru
      _
    %p174 = scmp.lt.s32.totalorder %s11, 2
    // Predicated region
    $region29: #{network_forward.1} parent=5 // pred_check
      %p175 = pneg %p174
    $region30: #{network_forward.1} parent=5 // pred_check_branch
      %177 = sbr.rel (%p175) target = $region32
    $region31: #{network_forward.1} parent=5 // pred_region
      // Predicated region
      $region33: #{network_forward.1} parent=31 // pred_check
        %p178 = pneg %p31
      $region34: #{network_forward.1} parent=31 // pred_check_branch
        %180 = sbr.rel (%p178) target = $region36
      $region35: #{network_forward.1} parent=31 // pred_region
        %s181 = smul.u32 32, %s11
        %p182 = scmp.lt.s32.totalorder %s181, 63
        %s183 = scalar_select %p182, %s181, 63
        %s184 = smul.addr %s183, 7
        %s185 = smul.addr %s184, 4
        %s186 = scalar_lea.vmem %s0, %s185
        %s187 = smul.u32 32, %s11
      $region36: #{network_forward.1} parent=31 // pred_fallthru
        _
    $region32: #{network_forward.1} parent=5 // pred_fallthru
      _
    %p188 = scmp.le.s32.totalorder 1, %s11
    %p189 = scmp.lt.s32.totalorder %s11, 3
    %p190 = pnand %p188, %p189
    %p191 = pneg %p190
    // Predicated region
    $region37: #{network_forward.1} parent=5 // pred_check
      _
    $region38: #{network_forward.1} parent=5 // pred_check_branch
      %193 = sbr.rel (%p190) target = $region40
    $region39: #{network_forward.1} parent=5 // pred_region
      %s194 = ssub.s32 %s11, 1
      %s195 = smul.u32 32, %s16
      %p196 = scmp.lt.s32.totalorder %s195, 63
      %s197 = scalar_select %p196, %s195, 63
      %s198 = smul.addr %s197, 7
      %s199 = smul.addr %s198, 4
      %s200 = scalar_lea.vmem %s0, %s199
      %p201 = pneg %p37
      %p202 = pneg %p34
      %p203 = pneg %p58
      %p204 = pneg %p55
      %p205 = pneg %p79
      %p206 = pneg %p76
      %p207 = pneg %p100
      %p208 = pneg %p97
      %p209 = pneg %p121
      %p210 = pneg %p118
      %p211 = pneg %p147
      %p212 = pneg %p144
      %s213 = smul.u32 32, %s16
      %p214 = scmp.lt.s32.totalorder %s213, 63
      %s215 = scalar_select %p214, %s213, 63
      %s216 = smul.addr %s215, 8
      %s217 = scalar_lea.vmem %s5, %s216
      %s218 = smul.u32 32, %s16
      %p219 = scmp.lt.s32.totalorder %s218, 63
      %s220 = scalar_select %p219, %s218, 63
      %s221 = smul.addr %s220, 7
      %s222 = smul.addr %s221, 4
      %s223 = scalar_lea.vmem %s0, %s222
      %s224 = smul.u32 32, %s16
      %s225 = smul.u32 32, %s16
      %p226 = scmp.lt.s32.totalorder %s225, 63
      %s227 = scalar_select %p226, %s225, 63
      %s228 = smul.addr %s227, 8
      %s229 = scalar_lea.vmem %s5, %s228
      %s230 = smul.u32 32, %s16
      %v232 = vld [vmem:[%s223] sm:$0xff]
      %v233 = vld [vmem:[%s223 + $0x8] sm:$0xff]
      %v234 = vld [vmem:[%s223 + $0x10] sm:$0xff]
      %v235 = vld [vmem:[%s223 + $0x18] sm:$0xf]
      %v236 = vld [vmem:[%s223 + $0x1c] sm:$0xff]
      %v237 = vld [vmem:[%s223 + $0x24] sm:$0xff]
      %v238 = vld [vmem:[%s223 + $0x2c] sm:$0xff]
      %v239 = vld [vmem:[%s223 + $0x34] sm:$0xf]
      %v240 = vld [vmem:[%s223 + $0x38] sm:$0xff]
      %v241 = vld [vmem:[%s223 + $0x40] sm:$0xff]
      %v242 = vld [vmem:[%s223 + $0x48] sm:$0xff]
      %v243 = vld [vmem:[%s223 + $0x50] sm:$0xf]
      %v244 = vld [vmem:[%s223 + $0x54] sm:$0xff]
      %v245 = vld [vmem:[%s223 + $0x5c] sm:$0xff]
      %v246 = vld [vmem:[%s223 + $0x64] sm:$0xff]
      %v247 = vld [vmem:[%s223 + $0x6c] sm:$0xf]
      %v248 = vld [vmem:[%s223 + $0x70] sm:$0xff]
      %v249 = vld [vmem:[%s223 + $0x78] sm:$0xff]
      %v250 = vld [vmem:[%s223 + $0x80] sm:$0xff]
      %v251 = vld [vmem:[%s223 + $0x88] sm:$0xf]
      %v252 = vld [vmem:[%s223 + $0x8c] sm:$0xff]
      %v253 = vld [vmem:[%s223 + $0x94] sm:$0xff]
      %v254 = vld [vmem:[%s223 + $0x9c] sm:$0xff]
      %v255 = vld [vmem:[%s223 + $0xa4] sm:$0xf]
      %v256 = vld [vmem:[%s223 + $0xa8] sm:$0xff]
      %v257 = vld [vmem:[%s223 + $0xb0] sm:$0xff]
      %v258 = vld [vmem:[%s223 + $0xb8] sm:$0xff]
      %v259 = vld [vmem:[%s223 + $0xc0] sm:$0xf]
      %v260 = vld [vmem:[%s223 + $0xc4] sm:$0xff]
      %v261 = vld [vmem:[%s223 + $0xcc] sm:$0xff]
      %v262 = vld [vmem:[%s223 + $0xd4] sm:$0xff]
      %v263 = vld [vmem:[%s223 + $0xdc] sm:$0xf]
      %v264 = vld [vmem:[%s223 + $0xe0] sm:$0xff]
      %v265 = vld [vmem:[%s223 + $0xe8] sm:$0xff]
      %v266 = vld [vmem:[%s223 + $0xf0] sm:$0xff]
      %v267 = vld [vmem:[%s223 + $0xf8] sm:$0xf]
      %v268 = vld [vmem:[%s223 + $0xfc] sm:$0xff]
      %v269 = vld [vmem:[%s223 + $0x104] sm:$0xff]
      %v270 = vld [vmem:[%s223 + $0x10c] sm:$0xff]
      %v271 = vld [vmem:[%s223 + $0x114] sm:$0xf]
      %v272 = vld [vmem:[%s223 + $0x118] sm:$0xff]
      %v273 = vld [vmem:[%s223 + $0x120] sm:$0xff]
      %v274 = vld [vmem:[%s223 + $0x128] sm:$0xff]
      %v275 = vld [vmem:[%s223 + $0x130] sm:$0xf]
      %v276 = vld [vmem:[%s223 + $0x134] sm:$0xff]
      %v277 = vld [vmem:[%s223 + $0x13c] sm:$0xff]
      %v278 = vld [vmem:[%s223 + $0x144] sm:$0xff]
      %v279 = vld [vmem:[%s223 + $0x14c] sm:$0xf]
      %v280 = vld [vmem:[%s223 + $0x150] sm:$0xff]
      %v281 = vld [vmem:[%s223 + $0x158] sm:$0xff]
      %v282 = vld [vmem:[%s223 + $0x160] sm:$0xff]
      %v283 = vld [vmem:[%s223 + $0x168] sm:$0xf]
      %v284 = vld [vmem:[%s223 + $0x16c] sm:$0xff]
      %v285 = vld [vmem:[%s223 + $0x174] sm:$0xff]
      %v286 = vld [vmem:[%s223 + $0x17c] sm:$0xff]
      %v287 = vld [vmem:[%s223 + $0x184] sm:$0xf]
      %v288 = vld [vmem:[%s223 + $0x188] sm:$0xff]
      %v289 = vld [vmem:[%s223 + $0x190] sm:$0xff]
      %v290 = vld [vmem:[%s223 + $0x198] sm:$0xff]
      %v291 = vld [vmem:[%s223 + $0x1a0] sm:$0xf]
      %v292 = vld [vmem:[%s223 + $0x1a4] sm:$0xff]
      %v293 = vld [vmem:[%s223 + $0x1ac] sm:$0xff]
      %v294 = vld [vmem:[%s223 + $0x1b4] sm:$0xff]
      %v295 = vld [vmem:[%s223 + $0x1bc] sm:$0xf]
      %v296 = vld [vmem:[%s223 + $0x1c0] sm:$0xff]
      %v297 = vld [vmem:[%s223 + $0x1c8] sm:$0xff]
      %v298 = vld [vmem:[%s223 + $0x1d0] sm:$0xff]
      %v299 = vld [vmem:[%s223 + $0x1d8] sm:$0xf]
      %v300 = vld [vmem:[%s223 + $0x1dc] sm:$0xff]
      %v301 = vld [vmem:[%s223 + $0x1e4] sm:$0xff]
      %v302 = vld [vmem:[%s223 + $0x1ec] sm:$0xff]
      %v303 = vld [vmem:[%s223 + $0x1f4] sm:$0xf]
      %v304 = vld [vmem:[%s223 + $0x1f8] sm:$0xff]
      %v305 = vld [vmem:[%s223 + $0x200] sm:$0xff]
      %v306 = vld [vmem:[%s223 + $0x208] sm:$0xff]
      %v307 = vld [vmem:[%s223 + $0x210] sm:$0xf]
      %v308 = vld [vmem:[%s223 + $0x214] sm:$0xff]
      %v309 = vld [vmem:[%s223 + $0x21c] sm:$0xff]
      %v310 = vld [vmem:[%s223 + $0x224] sm:$0xff]
      %v311 = vld [vmem:[%s223 + $0x22c] sm:$0xf]
      %v312 = vld [vmem:[%s223 + $0x230] sm:$0xff]
      %v313 = vld [vmem:[%s223 + $0x238] sm:$0xff]
      %v314 = vld [vmem:[%s223 + $0x240] sm:$0xff]
      %v315 = vld [vmem:[%s223 + $0x248] sm:$0xf]
      %v316 = vld [vmem:[%s223 + $0x24c] sm:$0xff]
      %v317 = vld [vmem:[%s223 + $0x254] sm:$0xff]
      %v318 = vld [vmem:[%s223 + $0x25c] sm:$0xff]
      %v319 = vld [vmem:[%s223 + $0x264] sm:$0xf]
      %v320 = vld [vmem:[%s223 + $0x268] sm:$0xff]
      %v321 = vld [vmem:[%s223 + $0x270] sm:$0xff]
      %v322 = vld [vmem:[%s223 + $0x278] sm:$0xff]
      %v323 = vld [vmem:[%s223 + $0x280] sm:$0xf]
      %v324 = vld [vmem:[%s223 + $0x284] sm:$0xff]
      %v325 = vld [vmem:[%s223 + $0x28c] sm:$0xff]
      %v326 = vld [vmem:[%s223 + $0x294] sm:$0xff]
      %v327 = vld [vmem:[%s223 + $0x29c] sm:$0xf]
      %v328 = vld [vmem:[%s223 + $0x2a0] sm:$0xff]
      %v329 = vld [vmem:[%s223 + $0x2a8] sm:$0xff]
      %v330 = vld [vmem:[%s223 + $0x2b0] sm:$0xff]
      %v331 = vld [vmem:[%s223 + $0x2b8] sm:$0xf]
      %v332 = vld [vmem:[%s223 + $0x2bc] sm:$0xff]
      %v333 = vld [vmem:[%s223 + $0x2c4] sm:$0xff]
      %v334 = vld [vmem:[%s223 + $0x2cc] sm:$0xff]
      %v335 = vld [vmem:[%s223 + $0x2d4] sm:$0xf]
      %v336 = vld [vmem:[%s223 + $0x2d8] sm:$0xff]
      %v337 = vld [vmem:[%s223 + $0x2e0] sm:$0xff]
      %v338 = vld [vmem:[%s223 + $0x2e8] sm:$0xff]
      %v339 = vld [vmem:[%s223 + $0x2f0] sm:$0xf]
      %v340 = vld [vmem:[%s223 + $0x2f4] sm:$0xff]
      %v341 = vld [vmem:[%s223 + $0x2fc] sm:$0xff]
      %v342 = vld [vmem:[%s223 + $0x304] sm:$0xff]
      %v343 = vld [vmem:[%s223 + $0x30c] sm:$0xf]
      %v344 = vld [vmem:[%s223 + $0x310] sm:$0xff]
      %v345 = vld [vmem:[%s223 + $0x318] sm:$0xff]
      %v346 = vld [vmem:[%s223 + $0x320] sm:$0xff]
      %v347 = vld [vmem:[%s223 + $0x328] sm:$0xf]
      %v348 = vld [vmem:[%s223 + $0x32c] sm:$0xff]
      %v349 = vld [vmem:[%s223 + $0x334] sm:$0xff]
      %v350 = vld [vmem:[%s223 + $0x33c] sm:$0xff]
      %v351 = vld [vmem:[%s223 + $0x344] sm:$0xf]
      %v352 = vld [vmem:[%s223 + $0x348] sm:$0xff]
      %v353 = vld [vmem:[%s223 + $0x350] sm:$0xff]
      %v354 = vld [vmem:[%s223 + $0x358] sm:$0xff]
      %v355 = vld [vmem:[%s223 + $0x360] sm:$0xf]
      %v356 = vld [vmem:[%s223 + $0x364] sm:$0xff]
      %v357 = vld [vmem:[%s223 + $0x36c] sm:$0xff]
      %v358 = vld [vmem:[%s223 + $0x374] sm:$0xff]
      %v359 = vld [vmem:[%s223 + $0x37c] sm:$0xf]
      %v360 = vld [vmem:[%s1] sm:$0xff]
      %v361 = vld [vmem:[%s1 + $0x8] sm:$0xff]
      %v362 = vld [vmem:[%s1 + $0x10] sm:$0xff]
      %v363 = vld [vmem:[%s1 + $0x18] sm:$0xff]
      %v364 = vld [vmem:[%s1 + $0x20] sm:$0xff]
      %v365 = vld [vmem:[%s1 + $0x28] sm:$0xff]
      %v366 = vld [vmem:[%s1 + $0x30] sm:$0xff]
      %v367 = vld [vmem:[%s1 + $0x38] sm:$0xff]
      %v368 = vld [vmem:[%s1 + $0x40] sm:$0xff]
      %v369 = vld [vmem:[%s1 + $0x48] sm:$0xff]
      %v370 = vld [vmem:[%s1 + $0x50] sm:$0xff]
      %v371 = vld [vmem:[%s1 + $0x58] sm:$0xff]
      %v372 = vld [vmem:[%s1 + $0x60] sm:$0xff]
      %v373 = vld [vmem:[%s1 + $0x68] sm:$0xff]
      %v374 = vld [vmem:[%s1 + $0x70] sm:$0xff]
      %v375 = vld [vmem:[%s1 + $0x78] sm:$0xff]
      %v376 = vld [vmem:[%s1 + $0x80] sm:$0xff]
      %v377 = vld [vmem:[%s1 + $0x88] sm:$0xff]
      %v378 = vld [vmem:[%s1 + $0x90] sm:$0xff]
      %v379 = vld [vmem:[%s1 + $0x98] sm:$0xff]
      %v380 = vld [vmem:[%s1 + $0xa0] sm:$0xff]
      %v381 = vld [vmem:[%s1 + $0xa8] sm:$0xff]
      %v382 = vld [vmem:[%s1 + $0xb0] sm:$0xff]
      %v383 = vld [vmem:[%s1 + $0xb8] sm:$0xff]
      %v384 = vld [vmem:[%s1 + $0xc0] sm:$0xff]
      %v385 = vld [vmem:[%s1 + $0xc8] sm:$0xff]
      %v386 = vld [vmem:[%s1 + $0xd0] sm:$0xff]
      %v387 = vld [vmem:[%s1 + $0xd8] sm:$0xff]
      %v388 = vld [vmem:[%s1 + $0xe0] sm:$0xff]
      %v389 = vld [vmem:[%s1 + $0xe8] sm:$0xff]
      %v390 = vld [vmem:[%s1 + $0xf0] sm:$0xff]
      %v391 = vld [vmem:[%s1 + $0xf8] sm:$0xff]
      %v392 = vld [vmem:[%s1 + $0x100] sm:$0xff]
      %v393 = vld [vmem:[%s1 + $0x108] sm:$0xff]
      %v394 = vld [vmem:[%s1 + $0x110] sm:$0xff]
      %v395 = vld [vmem:[%s1 + $0x118] sm:$0xff]
      %v396 = vld [vmem:[%s1 + $0x120] sm:$0xff]
      %v397 = vld [vmem:[%s1 + $0x128] sm:$0xff]
      %v398 = vld [vmem:[%s1 + $0x130] sm:$0xff]
      %v399 = vld [vmem:[%s1 + $0x138] sm:$0xff]
      %v400 = vld [vmem:[%s1 + $0x140] sm:$0xff]
      %v401 = vld [vmem:[%s1 + $0x148] sm:$0xff]
      %v402 = vld [vmem:[%s1 + $0x150] sm:$0xff]
      %v403 = vld [vmem:[%s1 + $0x158] sm:$0xff]
      %v404 = vld [vmem:[%s1 + $0x160] sm:$0xff]
      %v405 = vld [vmem:[%s1 + $0x168] sm:$0xff]
      %v406 = vld [vmem:[%s1 + $0x170] sm:$0xff]
      %v407 = vld [vmem:[%s1 + $0x178] sm:$0xff]
      %v408 = vld [vmem:[%s1 + $0x180] sm:$0xff]
      %v409 = vld [vmem:[%s1 + $0x188] sm:$0xff]
      %v410 = vld [vmem:[%s1 + $0x190] sm:$0xff]
      %v411 = vld [vmem:[%s1 + $0x198] sm:$0xff]
      %v412 = vld [vmem:[%s1 + $0x1a0] sm:$0xff]
      %v413 = vld [vmem:[%s1 + $0x1a8] sm:$0xff]
      %v414 = vld [vmem:[%s1 + $0x1b0] sm:$0xff]
      %v415 = vld [vmem:[%s1 + $0x1b8] sm:$0xff]
      %v416 = vld [vmem:[%s1 + $0x1c0] sm:$0xff]
      %v417 = vld [vmem:[%s1 + $0x1c8] sm:$0xff]
      %v418 = vld [vmem:[%s1 + $0x1d0] sm:$0xff]
      %v419 = vld [vmem:[%s1 + $0x1d8] sm:$0xff]
      %v420 = vld [vmem:[%s1 + $0x1e0] sm:$0xff]
      %v421 = vld [vmem:[%s1 + $0x1e8] sm:$0xff]
      %v422 = vld [vmem:[%s1 + $0x1f0] sm:$0xff]
      %v423 = vld [vmem:[%s1 + $0x1f8] sm:$0xff]
      %v424 = vld [vmem:[%s1 + $0x200] sm:$0xff]
      %v425 = vld [vmem:[%s1 + $0x208] sm:$0xff]
      %v426 = vld [vmem:[%s1 + $0x210] sm:$0xff]
      %v427 = vld [vmem:[%s1 + $0x218] sm:$0xff]
      %v428 = vld [vmem:[%s1 + $0x220] sm:$0xff]
      %v429 = vld [vmem:[%s1 + $0x228] sm:$0xff]
      %v430 = vld [vmem:[%s1 + $0x230] sm:$0xff]
      %v431 = vld [vmem:[%s1 + $0x238] sm:$0xff]
      %v432 = vld [vmem:[%s1 + $0x240] sm:$0xff]
      %v433 = vld [vmem:[%s1 + $0x248] sm:$0xff]
      %v434 = vld [vmem:[%s1 + $0x250] sm:$0xff]
      %v435 = vld [vmem:[%s1 + $0x258] sm:$0xff]
      %v436 = vld [vmem:[%s1 + $0x260] sm:$0xff]
      %v437 = vld [vmem:[%s1 + $0x268] sm:$0xff]
      %v438 = vld [vmem:[%s1 + $0x270] sm:$0xff]
      %v439 = vld [vmem:[%s1 + $0x278] sm:$0xff]
      %v440 = vld [vmem:[%s1 + $0x280] sm:$0xff]
      %v441 = vld [vmem:[%s1 + $0x288] sm:$0xff]
      %v442 = vld [vmem:[%s1 + $0x290] sm:$0xff]
      %v443 = vld [vmem:[%s1 + $0x298] sm:$0xff]
      %v444 = vld [vmem:[%s1 + $0x2a0] sm:$0xff]
      %v445 = vld [vmem:[%s1 + $0x2a8] sm:$0xff]
      %v446 = vld [vmem:[%s1 + $0x2b0] sm:$0xff]
      %v447 = vld [vmem:[%s1 + $0x2b8] sm:$0xff]
      %v448 = vld [vmem:[%s1 + $0x2c0] sm:$0xff]
      %v449 = vld [vmem:[%s1 + $0x2c8] sm:$0xff]
      %v450 = vld [vmem:[%s1 + $0x2d0] sm:$0xff]
      %v451 = vld [vmem:[%s1 + $0x2d8] sm:$0xff]
      %v452 = vld [vmem:[%s1 + $0x2e0] sm:$0xff]
      %v453 = vld [vmem:[%s1 + $0x2e8] sm:$0xff]
      %v454 = vld [vmem:[%s1 + $0x2f0] sm:$0xff]
      %v455 = vld [vmem:[%s1 + $0x2f8] sm:$0xff]
      %v456 = vld [vmem:[%s1 + $0x300] sm:$0xff]
      %v457 = vld [vmem:[%s1 + $0x308] sm:$0xff]
      %v458 = vld [vmem:[%s2] sm:$0x3]
      %v460 = vlaneseq
      %v461 = vshrl.u32 %v460, 7
      %v462 = vsub.s32 0, %v461
      %v463 = vrot.slane %v458, %v462
      %v464 = vlaneseq
      %v465 = vshrl.u32 %v464, 7
      %v466 = vsub.s32 1, %v465
      %v467 = vrot.slane %v458, %v466
      %v598 = vunpack.c.l.b16 %v232
      %v599 = vunpack.c.h.b16 %v232
      %v600 = vunpack.c.l.b16 %v233
      %v601 = vunpack.c.h.b16 %v233
      %v602 = vunpack.c.l.b16 %v234
      %v603 = vunpack.c.h.b16 %v234
      %v604 = vunpack.c.l.b16 %v235
      %v605 = vunpack.c.l.b16 %v236
      %v606 = vunpack.c.h.b16 %v236
      %v607 = vunpack.c.l.b16 %v237
      %v608 = vunpack.c.h.b16 %v237
      %v609 = vunpack.c.l.b16 %v238
      %v610 = vunpack.c.h.b16 %v238
      %v611 = vunpack.c.l.b16 %v239
      %v612 = vunpack.c.l.b16 %v240
      %v613 = vunpack.c.h.b16 %v240
      %v614 = vunpack.c.l.b16 %v241
      %v615 = vunpack.c.h.b16 %v241
      %v616 = vunpack.c.l.b16 %v242
      %v617 = vunpack.c.h.b16 %v242
      %v618 = vunpack.c.l.b16 %v243
      %v619 = vunpack.c.l.b16 %v244
      %v620 = vunpack.c.h.b16 %v244
      %v621 = vunpack.c.l.b16 %v245
      %v622 = vunpack.c.h.b16 %v245
      %v623 = vunpack.c.l.b16 %v246
      %v624 = vunpack.c.h.b16 %v246
      %v625 = vunpack.c.l.b16 %v247
      %v626 = vunpack.c.l.b16 %v248
      %v627 = vunpack.c.h.b16 %v248
      %v628 = vunpack.c.l.b16 %v249
      %v629 = vunpack.c.h.b16 %v249
      %v630 = vunpack.c.l.b16 %v250
      %v631 = vunpack.c.h.b16 %v250
      %v632 = vunpack.c.l.b16 %v251
      %v633 = vunpack.c.l.b16 %v252
      %v634 = vunpack.c.h.b16 %v252
      %v635 = vunpack.c.l.b16 %v253
      %v636 = vunpack.c.h.b16 %v253
      %v637 = vunpack.c.l.b16 %v254
      %v638 = vunpack.c.h.b16 %v254
      %v639 = vunpack.c.l.b16 %v255
      %v640 = vunpack.c.l.b16 %v256
      %v641 = vunpack.c.h.b16 %v256
      %v642 = vunpack.c.l.b16 %v257
      %v643 = vunpack.c.h.b16 %v257
      %v644 = vunpack.c.l.b16 %v258
      %v645 = vunpack.c.h.b16 %v258
      %v646 = vunpack.c.l.b16 %v259
      %v647 = vunpack.c.l.b16 %v260
      %v648 = vunpack.c.h.b16 %v260
      %v649 = vunpack.c.l.b16 %v261
      %v650 = vunpack.c.h.b16 %v261
      %v651 = vunpack.c.l.b16 %v262
      %v652 = vunpack.c.h.b16 %v262
      %v653 = vunpack.c.l.b16 %v263
      %v654 = vunpack.c.l.b16 %v264
      %v655 = vunpack.c.h.b16 %v264
      %v656 = vunpack.c.l.b16 %v265
      %v657 = vunpack.c.h.b16 %v265
      %v658 = vunpack.c.l.b16 %v266
      %v659 = vunpack.c.h.b16 %v266
      %v660 = vunpack.c.l.b16 %v267
      %v661 = vunpack.c.l.b16 %v268
      %v662 = vunpack.c.h.b16 %v268
      %v663 = vunpack.c.l.b16 %v269
      %v664 = vunpack.c.h.b16 %v269
      %v665 = vunpack.c.l.b16 %v270
      %v666 = vunpack.c.h.b16 %v270
      %v667 = vunpack.c.l.b16 %v271
      %v668 = vunpack.c.l.b16 %v272
      %v669 = vunpack.c.h.b16 %v272
      %v670 = vunpack.c.l.b16 %v273
      %v671 = vunpack.c.h.b16 %v273
      %v672 = vunpack.c.l.b16 %v274
      %v673 = vunpack.c.h.b16 %v274
      %v674 = vunpack.c.l.b16 %v275
      %v675 = vunpack.c.l.b16 %v276
      %v676 = vunpack.c.h.b16 %v276
      %v677 = vunpack.c.l.b16 %v277
      %v678 = vunpack.c.h.b16 %v277
      %v679 = vunpack.c.l.b16 %v278
      %v680 = vunpack.c.h.b16 %v278
      %v681 = vunpack.c.l.b16 %v279
      %v682 = vunpack.c.l.b16 %v280
      %v683 = vunpack.c.h.b16 %v280
      %v684 = vunpack.c.l.b16 %v281
      %v685 = vunpack.c.h.b16 %v281
      %v686 = vunpack.c.l.b16 %v282
      %v687 = vunpack.c.h.b16 %v282
      %v688 = vunpack.c.l.b16 %v283
      %v689 = vunpack.c.l.b16 %v284
      %v690 = vunpack.c.h.b16 %v284
      %v691 = vunpack.c.l.b16 %v285
      %v692 = vunpack.c.h.b16 %v285
      %v693 = vunpack.c.l.b16 %v286
      %v694 = vunpack.c.h.b16 %v286
      %v695 = vunpack.c.l.b16 %v287
      %v696 = vunpack.c.l.b16 %v288
      %v697 = vunpack.c.h.b16 %v288
      %v698 = vunpack.c.l.b16 %v289
      %v699 = vunpack.c.h.b16 %v289
      %v700 = vunpack.c.l.b16 %v290
      %v701 = vunpack.c.h.b16 %v290
      %v702 = vunpack.c.l.b16 %v291
      %v703 = vunpack.c.l.b16 %v292
      %v704 = vunpack.c.h.b16 %v292
      %v705 = vunpack.c.l.b16 %v293
      %v706 = vunpack.c.h.b16 %v293
      %v707 = vunpack.c.l.b16 %v294
      %v708 = vunpack.c.h.b16 %v294
      %v709 = vunpack.c.l.b16 %v295
      %v710 = vunpack.c.l.b16 %v296
      %v711 = vunpack.c.h.b16 %v296
      %v712 = vunpack.c.l.b16 %v297
      %v713 = vunpack.c.h.b16 %v297
      %v714 = vunpack.c.l.b16 %v298
      %v715 = vunpack.c.h.b16 %v298
      %v716 = vunpack.c.l.b16 %v299
      %v717 = vunpack.c.l.b16 %v300
      %v718 = vunpack.c.h.b16 %v300
      %v719 = vunpack.c.l.b16 %v301
      %v720 = vunpack.c.h.b16 %v301
      %v721 = vunpack.c.l.b16 %v302
      %v722 = vunpack.c.h.b16 %v302
      %v723 = vunpack.c.l.b16 %v303
      %v724 = vunpack.c.l.b16 %v304
      %v725 = vunpack.c.h.b16 %v304
      %v726 = vunpack.c.l.b16 %v305
      %v727 = vunpack.c.h.b16 %v305
      %v728 = vunpack.c.l.b16 %v306
      %v729 = vunpack.c.h.b16 %v306
      %v730 = vunpack.c.l.b16 %v307
      %v731 = vunpack.c.l.b16 %v308
      %v732 = vunpack.c.h.b16 %v308
      %v733 = vunpack.c.l.b16 %v309
      %v734 = vunpack.c.h.b16 %v309
      %v735 = vunpack.c.l.b16 %v310
      %v736 = vunpack.c.h.b16 %v310
      %v737 = vunpack.c.l.b16 %v311
      %v738 = vunpack.c.l.b16 %v312
      %v739 = vunpack.c.h.b16 %v312
      %v740 = vunpack.c.l.b16 %v313
      %v741 = vunpack.c.h.b16 %v313
      %v742 = vunpack.c.l.b16 %v314
      %v743 = vunpack.c.h.b16 %v314
      %v744 = vunpack.c.l.b16 %v315
      %v745 = vunpack.c.l.b16 %v316
      %v746 = vunpack.c.h.b16 %v316
      %v747 = vunpack.c.l.b16 %v317
      %v748 = vunpack.c.h.b16 %v317
      %v749 = vunpack.c.l.b16 %v318
      %v750 = vunpack.c.h.b16 %v318
      %v751 = vunpack.c.l.b16 %v319
      %v752 = vunpack.c.l.b16 %v320
      %v753 = vunpack.c.h.b16 %v320
      %v754 = vunpack.c.l.b16 %v321
      %v755 = vunpack.c.h.b16 %v321
      %v756 = vunpack.c.l.b16 %v322
      %v757 = vunpack.c.h.b16 %v322
      %v758 = vunpack.c.l.b16 %v323
      %v759 = vunpack.c.l.b16 %v324
      %v760 = vunpack.c.h.b16 %v324
      %v761 = vunpack.c.l.b16 %v325
      %v762 = vunpack.c.h.b16 %v325
      %v763 = vunpack.c.l.b16 %v326
      %v764 = vunpack.c.h.b16 %v326
      %v765 = vunpack.c.l.b16 %v327
      %v766 = vunpack.c.l.b16 %v328
      %v767 = vunpack.c.h.b16 %v328
      %v768 = vunpack.c.l.b16 %v329
      %v769 = vunpack.c.h.b16 %v329
      %v770 = vunpack.c.l.b16 %v330
      %v771 = vunpack.c.h.b16 %v330
      %v772 = vunpack.c.l.b16 %v331
      %v773 = vunpack.c.l.b16 %v332
      %v774 = vunpack.c.h.b16 %v332
      %v775 = vunpack.c.l.b16 %v333
      %v776 = vunpack.c.h.b16 %v333
      %v777 = vunpack.c.l.b16 %v334
      %v778 = vunpack.c.h.b16 %v334
      %v779 = vunpack.c.l.b16 %v335
      %v780 = vunpack.c.l.b16 %v336
      %v781 = vunpack.c.h.b16 %v336
      %v782 = vunpack.c.l.b16 %v337
      %v783 = vunpack.c.h.b16 %v337
      %v784 = vunpack.c.l.b16 %v338
      %v785 = vunpack.c.h.b16 %v338
      %v786 = vunpack.c.l.b16 %v339
      %v787 = vunpack.c.l.b16 %v340
      %v788 = vunpack.c.h.b16 %v340
      %v789 = vunpack.c.l.b16 %v341
      %v790 = vunpack.c.h.b16 %v341
      %v791 = vunpack.c.l.b16 %v342
      %v792 = vunpack.c.h.b16 %v342
      %v793 = vunpack.c.l.b16 %v343
      %v794 = vunpack.c.l.b16 %v344
      %v795 = vunpack.c.h.b16 %v344
      %v796 = vunpack.c.l.b16 %v345
      %v797 = vunpack.c.h.b16 %v345
      %v798 = vunpack.c.l.b16 %v346
      %v799 = vunpack.c.h.b16 %v346
      %v800 = vunpack.c.l.b16 %v347
      %v801 = vunpack.c.l.b16 %v348
      %v802 = vunpack.c.h.b16 %v348
      %v803 = vunpack.c.l.b16 %v349
      %v804 = vunpack.c.h.b16 %v349
      %v805 = vunpack.c.l.b16 %v350
      %v806 = vunpack.c.h.b16 %v350
      %v807 = vunpack.c.l.b16 %v351
      %v808 = vunpack.c.l.b16 %v352
      %v809 = vunpack.c.h.b16 %v352
      %v810 = vunpack.c.l.b16 %v353
      %v811 = vunpack.c.h.b16 %v353
      %v812 = vunpack.c.l.b16 %v354
      %v813 = vunpack.c.h.b16 %v354
      %v814 = vunpack.c.l.b16 %v355
      %v815 = vunpack.c.l.b16 %v356
      %v816 = vunpack.c.h.b16 %v356
      %v817 = vunpack.c.l.b16 %v357
      %v818 = vunpack.c.h.b16 %v357
      %v819 = vunpack.c.l.b16 %v358
      %v820 = vunpack.c.h.b16 %v358
      %v821 = vunpack.c.l.b16 %v359
      %v822 = vpack.c.b16 %v605, %v598
      %v823 = vpack.c.b16 %v606, %v599
      %v824 = vpack.c.b16 %v607, %v600
      %v825 = vpack.c.b16 %v608, %v601
      %v826 = vpack.c.b16 %v609, %v602
      %v827 = vpack.c.b16 %v610, %v603
      %v828 = vpack.c.b16 %v611, %v604
      %v829 = vpack.c.b16 %v619, %v612
      %v830 = vpack.c.b16 %v620, %v613
      %v831 = vpack.c.b16 %v621, %v614
      %v832 = vpack.c.b16 %v622, %v615
      %v833 = vpack.c.b16 %v623, %v616
      %v834 = vpack.c.b16 %v624, %v617
      %v835 = vpack.c.b16 %v625, %v618
      %v836 = vpack.c.b16 %v633, %v626
      %v837 = vpack.c.b16 %v634, %v627
      %v838 = vpack.c.b16 %v635, %v628
      %v839 = vpack.c.b16 %v636, %v629
      %v840 = vpack.c.b16 %v637, %v630
      %v841 = vpack.c.b16 %v638, %v631
      %v842 = vpack.c.b16 %v639, %v632
      %v843 = vpack.c.b16 %v647, %v640
      %v844 = vpack.c.b16 %v648, %v641
      %v845 = vpack.c.b16 %v649, %v642
      %v846 = vpack.c.b16 %v650, %v643
      %v847 = vpack.c.b16 %v651, %v644
      %v848 = vpack.c.b16 %v652, %v645
      %v849 = vpack.c.b16 %v653, %v646
      %v850 = vpack.c.b16 %v661, %v654
      %v851 = vpack.c.b16 %v662, %v655
      %v852 = vpack.c.b16 %v663, %v656
      %v853 = vpack.c.b16 %v664, %v657
      %v854 = vpack.c.b16 %v665, %v658
      %v855 = vpack.c.b16 %v666, %v659
      %v856 = vpack.c.b16 %v667, %v660
      %v857 = vpack.c.b16 %v675, %v668
      %v858 = vpack.c.b16 %v676, %v669
      %v859 = vpack.c.b16 %v677, %v670
      %v860 = vpack.c.b16 %v678, %v671
      %v861 = vpack.c.b16 %v679, %v672
      %v862 = vpack.c.b16 %v680, %v673
      %v863 = vpack.c.b16 %v681, %v674
      %v864 = vpack.c.b16 %v689, %v682
      %v865 = vpack.c.b16 %v690, %v683
      %v866 = vpack.c.b16 %v691, %v684
      %v867 = vpack.c.b16 %v692, %v685
      %v868 = vpack.c.b16 %v693, %v686
      %v869 = vpack.c.b16 %v694, %v687
      %v870 = vpack.c.b16 %v695, %v688
      %v871 = vpack.c.b16 %v703, %v696
      %v872 = vpack.c.b16 %v704, %v697
      %v873 = vpack.c.b16 %v705, %v698
      %v874 = vpack.c.b16 %v706, %v699
      %v875 = vpack.c.b16 %v707, %v700
      %v876 = vpack.c.b16 %v708, %v701
      %v877 = vpack.c.b16 %v709, %v702
      %v878 = vpack.c.b16 %v717, %v710
      %v879 = vpack.c.b16 %v718, %v711
      %v880 = vpack.c.b16 %v719, %v712
      %v881 = vpack.c.b16 %v720, %v713
      %v882 = vpack.c.b16 %v721, %v714
      %v883 = vpack.c.b16 %v722, %v715
      %v884 = vpack.c.b16 %v723, %v716
      %v885 = vpack.c.b16 %v731, %v724
      %v886 = vpack.c.b16 %v732, %v725
      %v887 = vpack.c.b16 %v733, %v726
      %v888 = vpack.c.b16 %v734, %v727
      %v889 = vpack.c.b16 %v735, %v728
      %v890 = vpack.c.b16 %v736, %v729
      %v891 = vpack.c.b16 %v737, %v730
      %v892 = vpack.c.b16 %v745, %v738
      %v893 = vpack.c.b16 %v746, %v739
      %v894 = vpack.c.b16 %v747, %v740
      %v895 = vpack.c.b16 %v748, %v741
      %v896 = vpack.c.b16 %v749, %v742
      %v897 = vpack.c.b16 %v750, %v743
      %v898 = vpack.c.b16 %v751, %v744
      %v899 = vpack.c.b16 %v759, %v752
      %v900 = vpack.c.b16 %v760, %v753
      %v901 = vpack.c.b16 %v761, %v754
      %v902 = vpack.c.b16 %v762, %v755
      %v903 = vpack.c.b16 %v763, %v756
      %v904 = vpack.c.b16 %v764, %v757
      %v905 = vpack.c.b16 %v765, %v758
      %v906 = vpack.c.b16 %v773, %v766
      %v907 = vpack.c.b16 %v774, %v767
      %v908 = vpack.c.b16 %v775, %v768
      %v909 = vpack.c.b16 %v776, %v769
      %v910 = vpack.c.b16 %v777, %v770
      %v911 = vpack.c.b16 %v778, %v771
      %v912 = vpack.c.b16 %v779, %v772
      %v913 = vpack.c.b16 %v787, %v780
      %v914 = vpack.c.b16 %v788, %v781
      %v915 = vpack.c.b16 %v789, %v782
      %v916 = vpack.c.b16 %v790, %v783
      %v917 = vpack.c.b16 %v791, %v784
      %v918 = vpack.c.b16 %v792, %v785
      %v919 = vpack.c.b16 %v793, %v786
      %v920 = vpack.c.b16 %v801, %v794
      %v921 = vpack.c.b16 %v802, %v795
      %v922 = vpack.c.b16 %v803, %v796
      %v923 = vpack.c.b16 %v804, %v797
      %v924 = vpack.c.b16 %v805, %v798
      %v925 = vpack.c.b16 %v806, %v799
      %v926 = vpack.c.b16 %v807, %v800
      %v927 = vpack.c.b16 %v815, %v808
      %v928 = vpack.c.b16 %v816, %v809
      %v929 = vpack.c.b16 %v817, %v810
      %v930 = vpack.c.b16 %v818, %v811
      %v931 = vpack.c.b16 %v819, %v812
      %v932 = vpack.c.b16 %v820, %v813
      %v933 = vpack.c.b16 %v821, %v814
      %v1128 = vunpack.c.l.b16 %v360
      %v1129 = vunpack.c.h.b16 %v360
      %v1130 = vunpack.c.l.b16 %v361
      %v1131 = vunpack.c.h.b16 %v361
      %v1132 = vunpack.c.l.b16 %v362
      %v1133 = vunpack.c.h.b16 %v362
      %v1134 = vunpack.c.l.b16 %v363
      %v1135 = vunpack.c.h.b16 %v363
      %v1136 = vunpack.c.l.b16 %v364
      %v1137 = vunpack.c.h.b16 %v364
      %v1138 = vunpack.c.l.b16 %v365
      %v1139 = vunpack.c.h.b16 %v365
      %v1140 = vunpack.c.l.b16 %v366
      %v1141 = vunpack.c.h.b16 %v366
      %v1142 = vunpack.c.l.b16 %v367
      %v1143 = vunpack.c.h.b16 %v367
      %v1144 = vunpack.c.l.b16 %v368
      %v1145 = vunpack.c.h.b16 %v368
      %v1146 = vunpack.c.l.b16 %v369
      %v1147 = vunpack.c.h.b16 %v369
      %v1148 = vunpack.c.l.b16 %v370
      %v1149 = vunpack.c.h.b16 %v370
      %v1150 = vunpack.c.l.b16 %v371
      %v1151 = vunpack.c.h.b16 %v371
      %v1152 = vunpack.c.l.b16 %v372
      %v1153 = vunpack.c.h.b16 %v372
      %v1154 = vunpack.c.l.b16 %v373
      %v1155 = vunpack.c.h.b16 %v373
      %v1156 = vunpack.c.l.b16 %v374
      %v1157 = vunpack.c.h.b16 %v374
      %v1158 = vunpack.c.l.b16 %v375
      %v1159 = vunpack.c.h.b16 %v375
      %v1160 = vunpack.c.l.b16 %v376
      %v1161 = vunpack.c.h.b16 %v376
      %v1162 = vunpack.c.l.b16 %v377
      %v1163 = vunpack.c.h.b16 %v377
      %v1164 = vunpack.c.l.b16 %v378
      %v1165 = vunpack.c.h.b16 %v378
      %v1166 = vunpack.c.l.b16 %v379
      %v1167 = vunpack.c.h.b16 %v379
      %v1168 = vunpack.c.l.b16 %v380
      %v1169 = vunpack.c.h.b16 %v380
      %v1170 = vunpack.c.l.b16 %v381
      %v1171 = vunpack.c.h.b16 %v381
      %v1172 = vunpack.c.l.b16 %v382
      %v1173 = vunpack.c.h.b16 %v382
      %v1174 = vunpack.c.l.b16 %v383
      %v1175 = vunpack.c.h.b16 %v383
      %v1176 = vunpack.c.l.b16 %v384
      %v1177 = vunpack.c.h.b16 %v384
      %v1178 = vunpack.c.l.b16 %v385
      %v1179 = vunpack.c.h.b16 %v385
      %v1180 = vunpack.c.l.b16 %v386
      %v1181 = vunpack.c.h.b16 %v386
      %v1182 = vunpack.c.l.b16 %v387
      %v1183 = vunpack.c.h.b16 %v387
      %v1184 = vunpack.c.l.b16 %v388
      %v1185 = vunpack.c.h.b16 %v388
      %v1186 = vunpack.c.l.b16 %v389
      %v1187 = vunpack.c.h.b16 %v389
      %v1188 = vunpack.c.l.b16 %v390
      %v1189 = vunpack.c.h.b16 %v390
      %v1190 = vunpack.c.l.b16 %v391
      %v1191 = vunpack.c.h.b16 %v391
      %v1192 = vunpack.c.l.b16 %v392
      %v1193 = vunpack.c.h.b16 %v392
      %v1194 = vunpack.c.l.b16 %v393
      %v1195 = vunpack.c.h.b16 %v393
      %v1196 = vunpack.c.l.b16 %v394
      %v1197 = vunpack.c.h.b16 %v394
      %v1198 = vunpack.c.l.b16 %v395
      %v1199 = vunpack.c.h.b16 %v395
      %v1200 = vunpack.c.l.b16 %v396
      %v1201 = vunpack.c.h.b16 %v396
      %v1202 = vunpack.c.l.b16 %v397
      %v1203 = vunpack.c.h.b16 %v397
      %v1204 = vunpack.c.l.b16 %v398
      %v1205 = vunpack.c.h.b16 %v398
      %v1206 = vunpack.c.l.b16 %v399
      %v1207 = vunpack.c.h.b16 %v399
      %v1208 = vunpack.c.l.b16 %v400
      %v1209 = vunpack.c.h.b16 %v400
      %v1210 = vunpack.c.l.b16 %v401
      %v1211 = vunpack.c.h.b16 %v401
      %v1212 = vunpack.c.l.b16 %v402
      %v1213 = vunpack.c.h.b16 %v402
      %v1214 = vunpack.c.l.b16 %v403
      %v1215 = vunpack.c.h.b16 %v403
      %v1216 = vunpack.c.l.b16 %v404
      %v1217 = vunpack.c.h.b16 %v404
      %v1218 = vunpack.c.l.b16 %v405
      %v1219 = vunpack.c.h.b16 %v405
      %v1220 = vunpack.c.l.b16 %v406
      %v1221 = vunpack.c.h.b16 %v406
      %v1222 = vunpack.c.l.b16 %v407
      %v1223 = vunpack.c.h.b16 %v407
      %v1224 = vunpack.c.l.b16 %v408
      %v1225 = vunpack.c.h.b16 %v408
      %v1226 = vunpack.c.l.b16 %v409
      %v1227 = vunpack.c.h.b16 %v409
      %v1228 = vunpack.c.l.b16 %v410
      %v1229 = vunpack.c.h.b16 %v410
      %v1230 = vunpack.c.l.b16 %v411
      %v1231 = vunpack.c.h.b16 %v411
      %v1232 = vunpack.c.l.b16 %v412
      %v1233 = vunpack.c.h.b16 %v412
      %v1234 = vunpack.c.l.b16 %v413
      %v1235 = vunpack.c.h.b16 %v413
      %v1236 = vunpack.c.l.b16 %v414
      %v1237 = vunpack.c.h.b16 %v414
      %v1238 = vunpack.c.l.b16 %v415
      %v1239 = vunpack.c.h.b16 %v415
      %v1240 = vunpack.c.l.b16 %v416
      %v1241 = vunpack.c.h.b16 %v416
      %v1242 = vunpack.c.l.b16 %v417
      %v1243 = vunpack.c.h.b16 %v417
      %v1244 = vunpack.c.l.b16 %v418
      %v1245 = vunpack.c.h.b16 %v418
      %v1246 = vunpack.c.l.b16 %v419
      %v1247 = vunpack.c.h.b16 %v419
      %v1248 = vunpack.c.l.b16 %v420
      %v1249 = vunpack.c.h.b16 %v420
      %v1250 = vunpack.c.l.b16 %v421
      %v1251 = vunpack.c.h.b16 %v421
      %v1252 = vunpack.c.l.b16 %v422
      %v1253 = vunpack.c.h.b16 %v422
      %v1254 = vunpack.c.l.b16 %v423
      %v1255 = vunpack.c.h.b16 %v423
      %v1256 = vunpack.c.l.b16 %v424
      %v1257 = vunpack.c.h.b16 %v424
      %v1258 = vunpack.c.l.b16 %v425
      %v1259 = vunpack.c.h.b16 %v425
      %v1260 = vunpack.c.l.b16 %v426
      %v1261 = vunpack.c.h.b16 %v426
      %v1262 = vunpack.c.l.b16 %v427
      %v1263 = vunpack.c.h.b16 %v427
      %v1264 = vunpack.c.l.b16 %v428
      %v1265 = vunpack.c.h.b16 %v428
      %v1266 = vunpack.c.l.b16 %v429
      %v1267 = vunpack.c.h.b16 %v429
      %v1268 = vunpack.c.l.b16 %v430
      %v1269 = vunpack.c.h.b16 %v430
      %v1270 = vunpack.c.l.b16 %v431
      %v1271 = vunpack.c.h.b16 %v431
      %v1272 = vunpack.c.l.b16 %v432
      %v1273 = vunpack.c.h.b16 %v432
      %v1274 = vunpack.c.l.b16 %v433
      %v1275 = vunpack.c.h.b16 %v433
      %v1276 = vunpack.c.l.b16 %v434
      %v1277 = vunpack.c.h.b16 %v434
      %v1278 = vunpack.c.l.b16 %v435
      %v1279 = vunpack.c.h.b16 %v435
      %v1280 = vunpack.c.l.b16 %v436
      %v1281 = vunpack.c.h.b16 %v436
      %v1282 = vunpack.c.l.b16 %v437
      %v1283 = vunpack.c.h.b16 %v437
      %v1284 = vunpack.c.l.b16 %v438
      %v1285 = vunpack.c.h.b16 %v438
      %v1286 = vunpack.c.l.b16 %v439
      %v1287 = vunpack.c.h.b16 %v439
      %v1288 = vunpack.c.l.b16 %v440
      %v1289 = vunpack.c.h.b16 %v440
      %v1290 = vunpack.c.l.b16 %v441
      %v1291 = vunpack.c.h.b16 %v441
      %v1292 = vunpack.c.l.b16 %v442
      %v1293 = vunpack.c.h.b16 %v442
      %v1294 = vunpack.c.l.b16 %v443
      %v1295 = vunpack.c.h.b16 %v443
      %v1296 = vunpack.c.l.b16 %v444
      %v1297 = vunpack.c.h.b16 %v444
      %v1298 = vunpack.c.l.b16 %v445
      %v1299 = vunpack.c.h.b16 %v445
      %v1300 = vunpack.c.l.b16 %v446
      %v1301 = vunpack.c.h.b16 %v446
      %v1302 = vunpack.c.l.b16 %v447
      %v1303 = vunpack.c.h.b16 %v447
      %v1304 = vunpack.c.l.b16 %v448
      %v1305 = vunpack.c.h.b16 %v448
      %v1306 = vunpack.c.l.b16 %v449
      %v1307 = vunpack.c.h.b16 %v449
      %v1308 = vunpack.c.l.b16 %v450
      %v1309 = vunpack.c.h.b16 %v450
      %v1310 = vunpack.c.l.b16 %v451
      %v1311 = vunpack.c.h.b16 %v451
      %v1312 = vunpack.c.l.b16 %v452
      %v1313 = vunpack.c.h.b16 %v452
      %v1314 = vunpack.c.l.b16 %v453
      %v1315 = vunpack.c.h.b16 %v453
      %v1316 = vunpack.c.l.b16 %v454
      %v1317 = vunpack.c.h.b16 %v454
      %v1318 = vunpack.c.l.b16 %v455
      %v1319 = vunpack.c.h.b16 %v455
      %v1320 = vunpack.c.l.b16 %v456
      %v1321 = vunpack.c.h.b16 %v456
      %v1322 = vunpack.c.l.b16 %v457
      %v1323 = vunpack.c.h.b16 %v457
      %v1324 = vpack.c.b16 %v1130, %v1128
      %v1325 = vpack.c.b16 %v1131, %v1129
      %v1326 = vpack.c.b16 %v1134, %v1132
      %v1327 = vpack.c.b16 %v1135, %v1133
      %v1328 = vpack.c.b16 %v1138, %v1136
      %v1329 = vpack.c.b16 %v1139, %v1137
      %v1330 = vpack.c.b16 %v1142, %v1140
      %v1331 = vpack.c.b16 %v1143, %v1141
      %v1332 = vpack.c.b16 %v1146, %v1144
      %v1333 = vpack.c.b16 %v1147, %v1145
      %v1334 = vpack.c.b16 %v1150, %v1148
      %v1335 = vpack.c.b16 %v1151, %v1149
      %v1336 = vpack.c.b16 %v1154, %v1152
      %v1337 = vpack.c.b16 %v1155, %v1153
      %v1338 = vpack.c.b16 %v1158, %v1156
      %v1339 = vpack.c.b16 %v1159, %v1157
      %v1340 = vpack.c.b16 %v1162, %v1160
      %v1341 = vpack.c.b16 %v1163, %v1161
      %v1342 = vpack.c.b16 %v1166, %v1164
      %v1343 = vpack.c.b16 %v1167, %v1165
      %v1344 = vpack.c.b16 %v1170, %v1168
      %v1345 = vpack.c.b16 %v1171, %v1169
      %v1346 = vpack.c.b16 %v1174, %v1172
      %v1347 = vpack.c.b16 %v1175, %v1173
      %v1348 = vpack.c.b16 %v1178, %v1176
      %v1349 = vpack.c.b16 %v1179, %v1177
      %v1350 = vpack.c.b16 %v1182, %v1180
      %v1351 = vpack.c.b16 %v1183, %v1181
      %v1352 = vpack.c.b16 %v1186, %v1184
      %v1353 = vpack.c.b16 %v1187, %v1185
      %v1354 = vpack.c.b16 %v1190, %v1188
      %v1355 = vpack.c.b16 %v1191, %v1189
      %v1356 = vpack.c.b16 %v1194, %v1192
      %v1357 = vpack.c.b16 %v1195, %v1193
      %v1358 = vpack.c.b16 %v1198, %v1196
      %v1359 = vpack.c.b16 %v1199, %v1197
      %v1360 = vpack.c.b16 %v1202, %v1200
      %v1361 = vpack.c.b16 %v1203, %v1201
      %v1362 = vpack.c.b16 %v1206, %v1204
      %v1363 = vpack.c.b16 %v1207, %v1205
      %v1364 = vpack.c.b16 %v1210, %v1208
      %v1365 = vpack.c.b16 %v1211, %v1209
      %v1366 = vpack.c.b16 %v1214, %v1212
      %v1367 = vpack.c.b16 %v1215, %v1213
      %v1368 = vpack.c.b16 %v1218, %v1216
      %v1369 = vpack.c.b16 %v1219, %v1217
      %v1370 = vpack.c.b16 %v1222, %v1220
      %v1371 = vpack.c.b16 %v1223, %v1221
      %v1372 = vpack.c.b16 %v1226, %v1224
      %v1373 = vpack.c.b16 %v1227, %v1225
      %v1374 = vpack.c.b16 %v1230, %v1228
      %v1375 = vpack.c.b16 %v1231, %v1229
      %v1376 = vpack.c.b16 %v1234, %v1232
      %v1377 = vpack.c.b16 %v1235, %v1233
      %v1378 = vpack.c.b16 %v1238, %v1236
      %v1379 = vpack.c.b16 %v1239, %v1237
      %v1380 = vpack.c.b16 %v1242, %v1240
      %v1381 = vpack.c.b16 %v1243, %v1241
      %v1382 = vpack.c.b16 %v1246, %v1244
      %v1383 = vpack.c.b16 %v1247, %v1245
      %v1384 = vpack.c.b16 %v1250, %v1248
      %v1385 = vpack.c.b16 %v1251, %v1249
      %v1386 = vpack.c.b16 %v1254, %v1252
      %v1387 = vpack.c.b16 %v1255, %v1253
      %v1388 = vpack.c.b16 %v1258, %v1256
      %v1389 = vpack.c.b16 %v1259, %v1257
      %v1390 = vpack.c.b16 %v1262, %v1260
      %v1391 = vpack.c.b16 %v1263, %v1261
      %v1392 = vpack.c.b16 %v1266, %v1264
      %v1393 = vpack.c.b16 %v1267, %v1265
      %v1394 = vpack.c.b16 %v1270, %v1268
      %v1395 = vpack.c.b16 %v1271, %v1269
      %v1396 = vpack.c.b16 %v1274, %v1272
      %v1397 = vpack.c.b16 %v1275, %v1273
      %v1398 = vpack.c.b16 %v1278, %v1276
      %v1399 = vpack.c.b16 %v1279, %v1277
      %v1400 = vpack.c.b16 %v1282, %v1280
      %v1401 = vpack.c.b16 %v1283, %v1281
      %v1402 = vpack.c.b16 %v1286, %v1284
      %v1403 = vpack.c.b16 %v1287, %v1285
      %v1404 = vpack.c.b16 %v1290, %v1288
      %v1405 = vpack.c.b16 %v1291, %v1289
      %v1406 = vpack.c.b16 %v1294, %v1292
      %v1407 = vpack.c.b16 %v1295, %v1293
      %v1408 = vpack.c.b16 %v1298, %v1296
      %v1409 = vpack.c.b16 %v1299, %v1297
      %v1410 = vpack.c.b16 %v1302, %v1300
      %v1411 = vpack.c.b16 %v1303, %v1301
      %v1412 = vpack.c.b16 %v1306, %v1304
      %v1413 = vpack.c.b16 %v1307, %v1305
      %v1414 = vpack.c.b16 %v1310, %v1308
      %v1415 = vpack.c.b16 %v1311, %v1309
      %v1416 = vpack.c.b16 %v1314, %v1312
      %v1417 = vpack.c.b16 %v1315, %v1313
      %v1418 = vpack.c.b16 %v1318, %v1316
      %v1419 = vpack.c.b16 %v1319, %v1317
      %v1420 = vpack.c.b16 %v1322, %v1320
      %v1421 = vpack.c.b16 %v1323, %v1321
      %vm1520 = vcmask 130048
      %v1522 = vsel %vm1520, %v828, 0
      %v1525 = vsel %vm1520, %v835, 0
      %v1528 = vsel %vm1520, %v842, 0
      %v1531 = vsel %vm1520, %v849, 0
      %v1534 = vsel %vm1520, %v856, 0
      %v1537 = vsel %vm1520, %v863, 0
      %v1540 = vsel %vm1520, %v870, 0
      %v1543 = vsel %vm1520, %v877, 0
      %v1546 = vsel %vm1520, %v884, 0
      %v1549 = vsel %vm1520, %v891, 0
      %v1552 = vsel %vm1520, %v898, 0
      %v1555 = vsel %vm1520, %v905, 0
      %v1558 = vsel %vm1520, %v912, 0
      %v1561 = vsel %vm1520, %v919, 0
      %v1564 = vsel %vm1520, %v926, 0
      %v1567 = vsel %vm1520, %v933, 0
      %1569 = vmatprep.subr.bf16.mxu0 %v1339
      %1570 = vmatpush1.bf16.msra.mxu0 %v1338
      %1571 = vmatprep.subr.bf16.mxu0 %v1337
      %1572 = vmatpush1.bf16.msra.mxu0 %v1336
      %1573 = vmatprep.subr.bf16.mxu0 %v1335
      %1574 = vmatpush1.bf16.msra.mxu0 %v1334
      %1575 = vmatprep.subr.bf16.mxu0 %v1333
      %1576 = vmatpush1.bf16.msra.mxu0 %v1332
      %1577 = vmatprep.subr.bf16.mxu0 %v1331
      %1578 = vmatpush1.bf16.msra.mxu0 %v1330
      %1579 = vmatprep.subr.bf16.mxu0 %v1329
      %1580 = vmatpush1.bf16.msra.mxu0 %v1328
      %1581 = vmatprep.subr.bf16.mxu0 %v1327
      %1582 = vmatpush1.bf16.msra.mxu0 %v1326
      %1583 = vmatprep.subr.bf16.mxu0 %v1325
      %1584 = vmatpush1.bf16.msra.mxu0 %v1324
      %1585 = vmatprep.subr.bf16.mxu0 %v1355
      %1586 = vmatpush2.bf16.msra.mxu0 %v1354
      %1587 = vmatprep.subr.bf16.mxu0 %v1353
      %1588 = vmatpush2.bf16.msra.mxu0 %v1352
      %1589 = vmatprep.subr.bf16.mxu0 %v1351
      %1590 = vmatpush2.bf16.msra.mxu0 %v1350
      %1591 = vmatprep.subr.bf16.mxu0 %v1349
      %1592 = vmatpush2.bf16.msra.mxu0 %v1348
      %1593 = vmatprep.subr.bf16.mxu0 %v1347
      %1594 = vmatpush2.bf16.msra.mxu0 %v1346
      %1595 = vmatprep.subr.bf16.mxu0 %v1345
      %1596 = vmatpush2.bf16.msra.mxu0 %v1344
      %1597 = vmatprep.subr.bf16.mxu0 %v1343
      %1598 = vmatpush2.bf16.msra.mxu0 %v1342
      %1599 = vmatprep.subr.bf16.mxu0 %v1341
      %1600 = vmatpush2.bf16.msra.mxu0 %v1340
      %1601 = vmatprep.mubr.bf16.mxu0 %v823
      %1602 = vmatmul.mubr.bf16.gmra.mxu0 %v822
      %v1603 = vpop.f32.mrf.mxu0
      %v1604 = vadd.f32 %v463, %v1603
      %v1605 = vpop.f32.mrf.mxu0
      %v1606 = vadd.f32 %v467, %v1605
      %v1607 = vpop.f32.mrf.mxu0
      %v1608 = vadd.f32 %v463, %v1607
      %v1609 = vpop.f32.mrf.mxu0
      %v1610 = vadd.f32 %v467, %v1609
      %1611 = vmatprep.mubr.bf16.mxu0 %v830
      %1612 = vmatmul.mubr.bf16.gmra.mxu0 %v829
      %v1613 = vpop.f32.mrf.mxu0
      %v1614 = vadd.f32 %v463, %v1613
      %v1615 = vpop.f32.mrf.mxu0
      %v1616 = vadd.f32 %v467, %v1615
      %v1617 = vpop.f32.mrf.mxu0
      %v1618 = vadd.f32 %v463, %v1617
      %v1619 = vpop.f32.mrf.mxu0
      %v1620 = vadd.f32 %v467, %v1619
      %1621 = vmatprep.mubr.bf16.mxu0 %v837
      %1622 = vmatmul.mubr.bf16.gmra.mxu0 %v836
      %v1623 = vpop.f32.mrf.mxu0
      %v1624 = vadd.f32 %v463, %v1623
      %v1625 = vpop.f32.mrf.mxu0
      %v1626 = vadd.f32 %v467, %v1625
      %v1627 = vpop.f32.mrf.mxu0
      %v1628 = vadd.f32 %v463, %v1627
      %v1629 = vpop.f32.mrf.mxu0
      %v1630 = vadd.f32 %v467, %v1629
      %1631 = vmatprep.mubr.bf16.mxu0 %v844
      %1632 = vmatmul.mubr.bf16.gmra.mxu0 %v843
      %v1633 = vpop.f32.mrf.mxu0
      %v1634 = vadd.f32 %v463, %v1633
      %v1635 = vpop.f32.mrf.mxu0
      %v1636 = vadd.f32 %v467, %v1635
      %v1637 = vpop.f32.mrf.mxu0
      %v1638 = vadd.f32 %v463, %v1637
      %v1639 = vpop.f32.mrf.mxu0
      %v1640 = vadd.f32 %v467, %v1639
      %1641 = vmatprep.mubr.bf16.mxu0 %v851
      %1642 = vmatmul.mubr.bf16.gmra.mxu0 %v850
      %v1643 = vpop.f32.mrf.mxu0
      %v1644 = vadd.f32 %v463, %v1643
      %v1645 = vpop.f32.mrf.mxu0
      %v1646 = vadd.f32 %v467, %v1645
      %v1647 = vpop.f32.mrf.mxu0
      %v1648 = vadd.f32 %v463, %v1647
      %v1649 = vpop.f32.mrf.mxu0
      %v1650 = vadd.f32 %v467, %v1649
      %1651 = vmatprep.mubr.bf16.mxu0 %v858
      %1652 = vmatmul.mubr.bf16.gmra.mxu0 %v857
      %v1653 = vpop.f32.mrf.mxu0
      %v1654 = vadd.f32 %v463, %v1653
      %v1655 = vpop.f32.mrf.mxu0
      %v1656 = vadd.f32 %v467, %v1655
      %v1657 = vpop.f32.mrf.mxu0
      %v1658 = vadd.f32 %v463, %v1657
      %v1659 = vpop.f32.mrf.mxu0
      %v1660 = vadd.f32 %v467, %v1659
      %1661 = vmatprep.mubr.bf16.mxu0 %v865
      %1662 = vmatmul.mubr.bf16.gmra.mxu0 %v864
      %v1663 = vpop.f32.mrf.mxu0
      %v1664 = vadd.f32 %v463, %v1663
      %v1665 = vpop.f32.mrf.mxu0
      %v1666 = vadd.f32 %v467, %v1665
      %v1667 = vpop.f32.mrf.mxu0
      %v1668 = vadd.f32 %v463, %v1667
      %v1669 = vpop.f32.mrf.mxu0
      %v1670 = vadd.f32 %v467, %v1669
      %1671 = vmatprep.mubr.bf16.mxu0 %v872
      %1672 = vmatmul.mubr.bf16.gmra.mxu0 %v871
      %v1673 = vpop.f32.mrf.mxu0
      %v1674 = vadd.f32 %v463, %v1673
      %v1675 = vpop.f32.mrf.mxu0
      %v1676 = vadd.f32 %v467, %v1675
      %v1677 = vpop.f32.mrf.mxu0
      %v1678 = vadd.f32 %v463, %v1677
      %v1679 = vpop.f32.mrf.mxu0
      %v1680 = vadd.f32 %v467, %v1679
      %1681 = vmatprep.mubr.bf16.mxu0 %v879
      %1682 = vmatmul.mubr.bf16.gmra.mxu0 %v878
      %v1683 = vpop.f32.mrf.mxu0
      %v1684 = vadd.f32 %v463, %v1683
      %v1685 = vpop.f32.mrf.mxu0
      %v1686 = vadd.f32 %v467, %v1685
      %v1687 = vpop.f32.mrf.mxu0
      %v1688 = vadd.f32 %v463, %v1687
      %v1689 = vpop.f32.mrf.mxu0
      %v1690 = vadd.f32 %v467, %v1689
      %1691 = vmatprep.mubr.bf16.mxu0 %v886
      %1692 = vmatmul.mubr.bf16.gmra.mxu0 %v885
      %v1693 = vpop.f32.mrf.mxu0
      %v1694 = vadd.f32 %v463, %v1693
      %v1695 = vpop.f32.mrf.mxu0
      %v1696 = vadd.f32 %v467, %v1695
      %v1697 = vpop.f32.mrf.mxu0
      %v1698 = vadd.f32 %v463, %v1697
      %v1699 = vpop.f32.mrf.mxu0
      %v1700 = vadd.f32 %v467, %v1699
      %1701 = vmatprep.mubr.bf16.mxu0 %v893
      %1702 = vmatmul.mubr.bf16.gmra.mxu0 %v892
      %v1703 = vpop.f32.mrf.mxu0
      %v1704 = vadd.f32 %v463, %v1703
      %v1705 = vpop.f32.mrf.mxu0
      %v1706 = vadd.f32 %v467, %v1705
      %v1707 = vpop.f32.mrf.mxu0
      %v1708 = vadd.f32 %v463, %v1707
      %v1709 = vpop.f32.mrf.mxu0
      %v1710 = vadd.f32 %v467, %v1709
      %1711 = vmatprep.mubr.bf16.mxu0 %v900
      %1712 = vmatmul.mubr.bf16.gmra.mxu0 %v899
      %v1713 = vpop.f32.mrf.mxu0
      %v1714 = vadd.f32 %v463, %v1713
      %v1715 = vpop.f32.mrf.mxu0
      %v1716 = vadd.f32 %v467, %v1715
      %v1717 = vpop.f32.mrf.mxu0
      %v1718 = vadd.f32 %v463, %v1717
      %v1719 = vpop.f32.mrf.mxu0
      %v1720 = vadd.f32 %v467, %v1719
      %1721 = vmatprep.mubr.bf16.mxu0 %v907
      %1722 = vmatmul.mubr.bf16.gmra.mxu0 %v906
      %v1723 = vpop.f32.mrf.mxu0
      %v1724 = vadd.f32 %v463, %v1723
      %v1725 = vpop.f32.mrf.mxu0
      %v1726 = vadd.f32 %v467, %v1725
      %v1727 = vpop.f32.mrf.mxu0
      %v1728 = vadd.f32 %v463, %v1727
      %v1729 = vpop.f32.mrf.mxu0
      %v1730 = vadd.f32 %v467, %v1729
      %1731 = vmatprep.mubr.bf16.mxu0 %v914
      %1732 = vmatmul.mubr.bf16.gmra.mxu0 %v913
      %v1733 = vpop.f32.mrf.mxu0
      %v1734 = vadd.f32 %v463, %v1733
      %v1735 = vpop.f32.mrf.mxu0
      %v1736 = vadd.f32 %v467, %v1735
      %v1737 = vpop.f32.mrf.mxu0
      %v1738 = vadd.f32 %v463, %v1737
      %v1739 = vpop.f32.mrf.mxu0
      %v1740 = vadd.f32 %v467, %v1739
      %1741 = vmatprep.mubr.bf16.mxu0 %v921
      %1742 = vmatmul.mubr.bf16.gmra.mxu0 %v920
      %v1743 = vpop.f32.mrf.mxu0
      %v1744 = vadd.f32 %v463, %v1743
      %v1745 = vpop.f32.mrf.mxu0
      %v1746 = vadd.f32 %v467, %v1745
      %v1747 = vpop.f32.mrf.mxu0
      %v1748 = vadd.f32 %v463, %v1747
      %v1749 = vpop.f32.mrf.mxu0
      %v1750 = vadd.f32 %v467, %v1749
      %1751 = vmatprep.mubr.bf16.mxu0 %v928
      %1752 = vmatmul.mubr.bf16.gmra.mxu0 %v927
      %v1753 = vpop.f32.mrf.mxu0
      %v1754 = vadd.f32 %v463, %v1753
      %v1755 = vpop.f32.mrf.mxu0
      %v1756 = vadd.f32 %v467, %v1755
      %v1757 = vpop.f32.mrf.mxu0
      %v1758 = vadd.f32 %v463, %v1757
      %v1759 = vpop.f32.mrf.mxu0
      %v1760 = vadd.f32 %v467, %v1759
      %1761 = vdwg.mxu0
      %1762 = vmatprep.subr.bf16.mxu0 %v1371
      %1763 = vmatpush1.bf16.msra.mxu0 %v1370
      %1764 = vmatprep.subr.bf16.mxu0 %v1369
      %1765 = vmatpush1.bf16.msra.mxu0 %v1368
      %1766 = vmatprep.subr.bf16.mxu0 %v1367
      %1767 = vmatpush1.bf16.msra.mxu0 %v1366
      %1768 = vmatprep.subr.bf16.mxu0 %v1365
      %1769 = vmatpush1.bf16.msra.mxu0 %v1364
      %1770 = vmatprep.subr.bf16.mxu0 %v1363
      %1771 = vmatpush1.bf16.msra.mxu0 %v1362
      %1772 = vmatprep.subr.bf16.mxu0 %v1361
      %1773 = vmatpush1.bf16.msra.mxu0 %v1360
      %1774 = vmatprep.subr.bf16.mxu0 %v1359
      %1775 = vmatpush1.bf16.msra.mxu0 %v1358
      %1776 = vmatprep.subr.bf16.mxu0 %v1357
      %1777 = vmatpush1.bf16.msra.mxu0 %v1356
      %1778 = vmatprep.subr.bf16.mxu0 %v1387
      %1779 = vmatpush2.bf16.msra.mxu0 %v1386
      %1780 = vmatprep.subr.bf16.mxu0 %v1385
      %1781 = vmatpush2.bf16.msra.mxu0 %v1384
      %1782 = vmatprep.subr.bf16.mxu0 %v1383
      %1783 = vmatpush2.bf16.msra.mxu0 %v1382
      %1784 = vmatprep.subr.bf16.mxu0 %v1381
      %1785 = vmatpush2.bf16.msra.mxu0 %v1380
      %1786 = vmatprep.subr.bf16.mxu0 %v1379
      %1787 = vmatpush2.bf16.msra.mxu0 %v1378
      %1788 = vmatprep.subr.bf16.mxu0 %v1377
      %1789 = vmatpush2.bf16.msra.mxu0 %v1376
      %1790 = vmatprep.subr.bf16.mxu0 %v1375
      %1791 = vmatpush2.bf16.msra.mxu0 %v1374
      %1792 = vmatprep.subr.bf16.mxu0 %v1373
      %1793 = vmatpush2.bf16.msra.mxu0 %v1372
      %1794 = vmatprep.mubr.bf16.mxu0 %v825
      %1795 = vmatmul.mubr.bf16.gmra.mxu0 %v824
      %v1796 = vpop.f32.mrf.mxu0
      %v1797 = vadd.f32 %v1604, %v1796
      %v1798 = vpop.f32.mrf.mxu0
      %v1799 = vadd.f32 %v1606, %v1798
      %v1800 = vpop.f32.mrf.mxu0
      %v1801 = vadd.f32 %v1608, %v1800
      %v1802 = vpop.f32.mrf.mxu0
      %v1803 = vadd.f32 %v1610, %v1802
      %1804 = vmatprep.mubr.bf16.mxu0 %v832
      %1805 = vmatmul.mubr.bf16.gmra.mxu0 %v831
      %v1806 = vpop.f32.mrf.mxu0
      %v1807 = vadd.f32 %v1614, %v1806
      %v1808 = vpop.f32.mrf.mxu0
      %v1809 = vadd.f32 %v1616, %v1808
      %v1810 = vpop.f32.mrf.mxu0
      %v1811 = vadd.f32 %v1618, %v1810
      %v1812 = vpop.f32.mrf.mxu0
      %v1813 = vadd.f32 %v1620, %v1812
      %1814 = vmatprep.mubr.bf16.mxu0 %v839
      %1815 = vmatmul.mubr.bf16.gmra.mxu0 %v838
      %v1816 = vpop.f32.mrf.mxu0
      %v1817 = vadd.f32 %v1624, %v1816
      %v1818 = vpop.f32.mrf.mxu0
      %v1819 = vadd.f32 %v1626, %v1818
      %v1820 = vpop.f32.mrf.mxu0
      %v1821 = vadd.f32 %v1628, %v1820
      %v1822 = vpop.f32.mrf.mxu0
      %v1823 = vadd.f32 %v1630, %v1822
      %1824 = vmatprep.mubr.bf16.mxu0 %v846
      %1825 = vmatmul.mubr.bf16.gmra.mxu0 %v845
      %v1826 = vpop.f32.mrf.mxu0
      %v1827 = vadd.f32 %v1634, %v1826
      %v1828 = vpop.f32.mrf.mxu0
      %v1829 = vadd.f32 %v1636, %v1828
      %v1830 = vpop.f32.mrf.mxu0
      %v1831 = vadd.f32 %v1638, %v1830
      %v1832 = vpop.f32.mrf.mxu0
      %v1833 = vadd.f32 %v1640, %v1832
      %1834 = vmatprep.mubr.bf16.mxu0 %v853
      %1835 = vmatmul.mubr.bf16.gmra.mxu0 %v852
      %v1836 = vpop.f32.mrf.mxu0
      %v1837 = vadd.f32 %v1644, %v1836
      %v1838 = vpop.f32.mrf.mxu0
      %v1839 = vadd.f32 %v1646, %v1838
      %v1840 = vpop.f32.mrf.mxu0
      %v1841 = vadd.f32 %v1648, %v1840
      %v1842 = vpop.f32.mrf.mxu0
      %v1843 = vadd.f32 %v1650, %v1842
      %1844 = vmatprep.mubr.bf16.mxu0 %v860
      %1845 = vmatmul.mubr.bf16.gmra.mxu0 %v859
      %v1846 = vpop.f32.mrf.mxu0
      %v1847 = vadd.f32 %v1654, %v1846
      %v1848 = vpop.f32.mrf.mxu0
      %v1849 = vadd.f32 %v1656, %v1848
      %v1850 = vpop.f32.mrf.mxu0
      %v1851 = vadd.f32 %v1658, %v1850
      %v1852 = vpop.f32.mrf.mxu0
      %v1853 = vadd.f32 %v1660, %v1852
      %1854 = vmatprep.mubr.bf16.mxu0 %v867
      %1855 = vmatmul.mubr.bf16.gmra.mxu0 %v866
      %v1856 = vpop.f32.mrf.mxu0
      %v1857 = vadd.f32 %v1664, %v1856
      %v1858 = vpop.f32.mrf.mxu0
      %v1859 = vadd.f32 %v1666, %v1858
      %v1860 = vpop.f32.mrf.mxu0
      %v1861 = vadd.f32 %v1668, %v1860
      %v1862 = vpop.f32.mrf.mxu0
      %v1863 = vadd.f32 %v1670, %v1862
      %1864 = vmatprep.mubr.bf16.mxu0 %v874
      %1865 = vmatmul.mubr.bf16.gmra.mxu0 %v873
      %v1866 = vpop.f32.mrf.mxu0
      %v1867 = vadd.f32 %v1674, %v1866
      %v1868 = vpop.f32.mrf.mxu0
      %v1869 = vadd.f32 %v1676, %v1868
      %v1870 = vpop.f32.mrf.mxu0
      %v1871 = vadd.f32 %v1678, %v1870
      %v1872 = vpop.f32.mrf.mxu0
      %v1873 = vadd.f32 %v1680, %v1872
      %1874 = vmatprep.mubr.bf16.mxu0 %v881
      %1875 = vmatmul.mubr.bf16.gmra.mxu0 %v880
      %v1876 = vpop.f32.mrf.mxu0
      %v1877 = vadd.f32 %v1684, %v1876
      %v1878 = vpop.f32.mrf.mxu0
      %v1879 = vadd.f32 %v1686, %v1878
      %v1880 = vpop.f32.mrf.mxu0
      %v1881 = vadd.f32 %v1688, %v1880
      %v1882 = vpop.f32.mrf.mxu0
      %v1883 = vadd.f32 %v1690, %v1882
      %1884 = vmatprep.mubr.bf16.mxu0 %v888
      %1885 = vmatmul.mubr.bf16.gmra.mxu0 %v887
      %v1886 = vpop.f32.mrf.mxu0
      %v1887 = vadd.f32 %v1694, %v1886
      %v1888 = vpop.f32.mrf.mxu0
      %v1889 = vadd.f32 %v1696, %v1888
      %v1890 = vpop.f32.mrf.mxu0
      %v1891 = vadd.f32 %v1698, %v1890
      %v1892 = vpop.f32.mrf.mxu0
      %v1893 = vadd.f32 %v1700, %v1892
      %1894 = vmatprep.mubr.bf16.mxu0 %v895
      %1895 = vmatmul.mubr.bf16.gmra.mxu0 %v894
      %v1896 = vpop.f32.mrf.mxu0
      %v1897 = vadd.f32 %v1704, %v1896
      %v1898 = vpop.f32.mrf.mxu0
      %v1899 = vadd.f32 %v1706, %v1898
      %v1900 = vpop.f32.mrf.mxu0
      %v1901 = vadd.f32 %v1708, %v1900
      %v1902 = vpop.f32.mrf.mxu0
      %v1903 = vadd.f32 %v1710, %v1902
      %1904 = vmatprep.mubr.bf16.mxu0 %v902
      %1905 = vmatmul.mubr.bf16.gmra.mxu0 %v901
      %v1906 = vpop.f32.mrf.mxu0
      %v1907 = vadd.f32 %v1714, %v1906
      %v1908 = vpop.f32.mrf.mxu0
      %v1909 = vadd.f32 %v1716, %v1908
      %v1910 = vpop.f32.mrf.mxu0
      %v1911 = vadd.f32 %v1718, %v1910
      %v1912 = vpop.f32.mrf.mxu0
      %v1913 = vadd.f32 %v1720, %v1912
      %1914 = vmatprep.mubr.bf16.mxu0 %v909
      %1915 = vmatmul.mubr.bf16.gmra.mxu0 %v908
      %v1916 = vpop.f32.mrf.mxu0
      %v1917 = vadd.f32 %v1724, %v1916
      %v1918 = vpop.f32.mrf.mxu0
      %v1919 = vadd.f32 %v1726, %v1918
      %v1920 = vpop.f32.mrf.mxu0
      %v1921 = vadd.f32 %v1728, %v1920
      %v1922 = vpop.f32.mrf.mxu0
      %v1923 = vadd.f32 %v1730, %v1922
      %1924 = vmatprep.mubr.bf16.mxu0 %v916
      %1925 = vmatmul.mubr.bf16.gmra.mxu0 %v915
      %v1926 = vpop.f32.mrf.mxu0
      %v1927 = vadd.f32 %v1734, %v1926
      %v1928 = vpop.f32.mrf.mxu0
      %v1929 = vadd.f32 %v1736, %v1928
      %v1930 = vpop.f32.mrf.mxu0
      %v1931 = vadd.f32 %v1738, %v1930
      %v1932 = vpop.f32.mrf.mxu0
      %v1933 = vadd.f32 %v1740, %v1932
      %1934 = vmatprep.mubr.bf16.mxu0 %v923
      %1935 = vmatmul.mubr.bf16.gmra.mxu0 %v922
      %v1936 = vpop.f32.mrf.mxu0
      %v1937 = vadd.f32 %v1744, %v1936
      %v1938 = vpop.f32.mrf.mxu0
      %v1939 = vadd.f32 %v1746, %v1938
      %v1940 = vpop.f32.mrf.mxu0
      %v1941 = vadd.f32 %v1748, %v1940
      %v1942 = vpop.f32.mrf.mxu0
      %v1943 = vadd.f32 %v1750, %v1942
      %1944 = vmatprep.mubr.bf16.mxu0 %v930
      %1945 = vmatmul.mubr.bf16.gmra.mxu0 %v929
      %v1946 = vpop.f32.mrf.mxu0
      %v1947 = vadd.f32 %v1754, %v1946
      %v1948 = vpop.f32.mrf.mxu0
      %v1949 = vadd.f32 %v1756, %v1948
      %v1950 = vpop.f32.mrf.mxu0
      %v1951 = vadd.f32 %v1758, %v1950
      %v1952 = vpop.f32.mrf.mxu0
      %v1953 = vadd.f32 %v1760, %v1952
      %1954 = vdwg.mxu0
      %1955 = vmatprep.subr.bf16.mxu0 %v1403
      %1956 = vmatpush1.bf16.msra.mxu0 %v1402
      %1957 = vmatprep.subr.bf16.mxu0 %v1401
      %1958 = vmatpush1.bf16.msra.mxu0 %v1400
      %1959 = vmatprep.subr.bf16.mxu0 %v1399
      %1960 = vmatpush1.bf16.msra.mxu0 %v1398
      %1961 = vmatprep.subr.bf16.mxu0 %v1397
      %1962 = vmatpush1.bf16.msra.mxu0 %v1396
      %1963 = vmatprep.subr.bf16.mxu0 %v1395
      %1964 = vmatpush1.bf16.msra.mxu0 %v1394
      %1965 = vmatprep.subr.bf16.mxu0 %v1393
      %1966 = vmatpush1.bf16.msra.mxu0 %v1392
      %1967 = vmatprep.subr.bf16.mxu0 %v1391
      %1968 = vmatpush1.bf16.msra.mxu0 %v1390
      %1969 = vmatprep.subr.bf16.mxu0 %v1389
      %1970 = vmatpush1.bf16.msra.mxu0 %v1388
      %1971 = vmatprep.subr.bf16.mxu0 %v1419
      %1972 = vmatpush2.bf16.msra.mxu0 %v1418
      %1973 = vmatprep.subr.bf16.mxu0 %v1417
      %1974 = vmatpush2.bf16.msra.mxu0 %v1416
      %1975 = vmatprep.subr.bf16.mxu0 %v1415
      %1976 = vmatpush2.bf16.msra.mxu0 %v1414
      %1977 = vmatprep.subr.bf16.mxu0 %v1413
      %1978 = vmatpush2.bf16.msra.mxu0 %v1412
      %1979 = vmatprep.subr.bf16.mxu0 %v1411
      %1980 = vmatpush2.bf16.msra.mxu0 %v1410
      %1981 = vmatprep.subr.bf16.mxu0 %v1409
      %1982 = vmatpush2.bf16.msra.mxu0 %v1408
      %1983 = vmatprep.subr.bf16.mxu0 %v1407
      %1984 = vmatpush2.bf16.msra.mxu0 %v1406
      %1985 = vmatprep.subr.bf16.mxu0 %v1405
      %1986 = vmatpush2.bf16.msra.mxu0 %v1404
      %1987 = vmatprep.mubr.bf16.mxu0 %v827
      %1988 = vmatmul.mubr.bf16.gmra.mxu0 %v826
      %v1989 = vpop.f32.mrf.mxu0
      %v1990 = vadd.f32 %v1797, %v1989
      %v1991 = vpop.f32.mrf.mxu0
      %v1992 = vadd.f32 %v1799, %v1991
      %v1993 = vpop.f32.mrf.mxu0
      %v1994 = vadd.f32 %v1801, %v1993
      %v1995 = vpop.f32.mrf.mxu0
      %v1996 = vadd.f32 %v1803, %v1995
      %1997 = vmatprep.mubr.bf16.mxu0 %v834
      %1998 = vmatmul.mubr.bf16.gmra.mxu0 %v833
      %v1999 = vpop.f32.mrf.mxu0
      %v2000 = vadd.f32 %v1807, %v1999
      %v2001 = vpop.f32.mrf.mxu0
      %v2002 = vadd.f32 %v1809, %v2001
      %v2003 = vpop.f32.mrf.mxu0
      %v2004 = vadd.f32 %v1811, %v2003
      %v2005 = vpop.f32.mrf.mxu0
      %v2006 = vadd.f32 %v1813, %v2005
      %2007 = vmatprep.mubr.bf16.mxu0 %v841
      %2008 = vmatmul.mubr.bf16.gmra.mxu0 %v840
      %v2009 = vpop.f32.mrf.mxu0
      %v2010 = vadd.f32 %v1817, %v2009
      %v2011 = vpop.f32.mrf.mxu0
      %v2012 = vadd.f32 %v1819, %v2011
      %v2013 = vpop.f32.mrf.mxu0
      %v2014 = vadd.f32 %v1821, %v2013
      %v2015 = vpop.f32.mrf.mxu0
      %v2016 = vadd.f32 %v1823, %v2015
      %2017 = vmatprep.mubr.bf16.mxu0 %v848
      %2018 = vmatmul.mubr.bf16.gmra.mxu0 %v847
      %v2019 = vpop.f32.mrf.mxu0
      %v2020 = vadd.f32 %v1827, %v2019
      %v2021 = vpop.f32.mrf.mxu0
      %v2022 = vadd.f32 %v1829, %v2021
      %v2023 = vpop.f32.mrf.mxu0
      %v2024 = vadd.f32 %v1831, %v2023
      %v2025 = vpop.f32.mrf.mxu0
      %v2026 = vadd.f32 %v1833, %v2025
      %2027 = vmatprep.mubr.bf16.mxu0 %v855
      %2028 = vmatmul.mubr.bf16.gmra.mxu0 %v854
      %v2029 = vpop.f32.mrf.mxu0
      %v2030 = vadd.f32 %v1837, %v2029
      %v2031 = vpop.f32.mrf.mxu0
      %v2032 = vadd.f32 %v1839, %v2031
      %v2033 = vpop.f32.mrf.mxu0
      %v2034 = vadd.f32 %v1841, %v2033
      %v2035 = vpop.f32.mrf.mxu0
      %v2036 = vadd.f32 %v1843, %v2035
      %2037 = vmatprep.mubr.bf16.mxu0 %v862
      %2038 = vmatmul.mubr.bf16.gmra.mxu0 %v861
      %v2039 = vpop.f32.mrf.mxu0
      %v2040 = vadd.f32 %v1847, %v2039
      %v2041 = vpop.f32.mrf.mxu0
      %v2042 = vadd.f32 %v1849, %v2041
      %v2043 = vpop.f32.mrf.mxu0
      %v2044 = vadd.f32 %v1851, %v2043
      %v2045 = vpop.f32.mrf.mxu0
      %v2046 = vadd.f32 %v1853, %v2045
      %2047 = vmatprep.mubr.bf16.mxu0 %v869
      %2048 = vmatmul.mubr.bf16.gmra.mxu0 %v868
      %v2049 = vpop.f32.mrf.mxu0
      %v2050 = vadd.f32 %v1857, %v2049
      %v2051 = vpop.f32.mrf.mxu0
      %v2052 = vadd.f32 %v1859, %v2051
      %v2053 = vpop.f32.mrf.mxu0
      %v2054 = vadd.f32 %v1861, %v2053
      %v2055 = vpop.f32.mrf.mxu0
      %v2056 = vadd.f32 %v1863, %v2055
      %2057 = vmatprep.mubr.bf16.mxu0 %v876
      %2058 = vmatmul.mubr.bf16.gmra.mxu0 %v875
      %v2059 = vpop.f32.mrf.mxu0
      %v2060 = vadd.f32 %v1867, %v2059
      %v2061 = vpop.f32.mrf.mxu0
      %v2062 = vadd.f32 %v1869, %v2061
      %v2063 = vpop.f32.mrf.mxu0
      %v2064 = vadd.f32 %v1871, %v2063
      %v2065 = vpop.f32.mrf.mxu0
      %v2066 = vadd.f32 %v1873, %v2065
      %2067 = vmatprep.mubr.bf16.mxu0 %v883
      %2068 = vmatmul.mubr.bf16.gmra.mxu0 %v882
      %v2069 = vpop.f32.mrf.mxu0
      %v2070 = vadd.f32 %v1877, %v2069
      %v2071 = vpop.f32.mrf.mxu0
      %v2072 = vadd.f32 %v1879, %v2071
      %v2073 = vpop.f32.mrf.mxu0
      %v2074 = vadd.f32 %v1881, %v2073
      %v2075 = vpop.f32.mrf.mxu0
      %v2076 = vadd.f32 %v1883, %v2075
      %2077 = vmatprep.mubr.bf16.mxu0 %v890
      %2078 = vmatmul.mubr.bf16.gmra.mxu0 %v889
      %v2079 = vpop.f32.mrf.mxu0
      %v2080 = vadd.f32 %v1887, %v2079
      %v2081 = vpop.f32.mrf.mxu0
      %v2082 = vadd.f32 %v1889, %v2081
      %v2083 = vpop.f32.mrf.mxu0
      %v2084 = vadd.f32 %v1891, %v2083
      %v2085 = vpop.f32.mrf.mxu0
      %v2086 = vadd.f32 %v1893, %v2085
      %2087 = vmatprep.mubr.bf16.mxu0 %v897
      %2088 = vmatmul.mubr.bf16.gmra.mxu0 %v896
      %v2089 = vpop.f32.mrf.mxu0
      %v2090 = vadd.f32 %v1897, %v2089
      %v2091 = vpop.f32.mrf.mxu0
      %v2092 = vadd.f32 %v1899, %v2091
      %v2093 = vpop.f32.mrf.mxu0
      %v2094 = vadd.f32 %v1901, %v2093
      %v2095 = vpop.f32.mrf.mxu0
      %v2096 = vadd.f32 %v1903, %v2095
      %2097 = vmatprep.mubr.bf16.mxu0 %v904
      %2098 = vmatmul.mubr.bf16.gmra.mxu0 %v903
      %v2099 = vpop.f32.mrf.mxu0
      %v2100 = vadd.f32 %v1907, %v2099
      %v2101 = vpop.f32.mrf.mxu0
      %v2102 = vadd.f32 %v1909, %v2101
      %v2103 = vpop.f32.mrf.mxu0
      %v2104 = vadd.f32 %v1911, %v2103
      %v2105 = vpop.f32.mrf.mxu0
      %v2106 = vadd.f32 %v1913, %v2105
      %2107 = vmatprep.mubr.bf16.mxu0 %v911
      %2108 = vmatmul.mubr.bf16.gmra.mxu0 %v910
      %v2109 = vpop.f32.mrf.mxu0
      %v2110 = vadd.f32 %v1917, %v2109
      %v2111 = vpop.f32.mrf.mxu0
      %v2112 = vadd.f32 %v1919, %v2111
      %v2113 = vpop.f32.mrf.mxu0
      %v2114 = vadd.f32 %v1921, %v2113
      %v2115 = vpop.f32.mrf.mxu0
      %v2116 = vadd.f32 %v1923, %v2115
      %2117 = vmatprep.mubr.bf16.mxu0 %v918
      %2118 = vmatmul.mubr.bf16.gmra.mxu0 %v917
      %v2119 = vpop.f32.mrf.mxu0
      %v2120 = vadd.f32 %v1927, %v2119
      %v2121 = vpop.f32.mrf.mxu0
      %v2122 = vadd.f32 %v1929, %v2121
      %v2123 = vpop.f32.mrf.mxu0
      %v2124 = vadd.f32 %v1931, %v2123
      %v2125 = vpop.f32.mrf.mxu0
      %v2126 = vadd.f32 %v1933, %v2125
      %2127 = vmatprep.mubr.bf16.mxu0 %v925
      %2128 = vmatmul.mubr.bf16.gmra.mxu0 %v924
      %v2129 = vpop.f32.mrf.mxu0
      %v2130 = vadd.f32 %v1937, %v2129
      %v2131 = vpop.f32.mrf.mxu0
      %v2132 = vadd.f32 %v1939, %v2131
      %v2133 = vpop.f32.mrf.mxu0
      %v2134 = vadd.f32 %v1941, %v2133
      %v2135 = vpop.f32.mrf.mxu0
      %v2136 = vadd.f32 %v1943, %v2135
      %2137 = vmatprep.mubr.bf16.mxu0 %v932
      %2138 = vmatmul.mubr.bf16.gmra.mxu0 %v931
      %v2139 = vpop.f32.mrf.mxu0
      %v2140 = vadd.f32 %v1947, %v2139
      %v2141 = vpop.f32.mrf.mxu0
      %v2142 = vadd.f32 %v1949, %v2141
      %v2143 = vpop.f32.mrf.mxu0
      %v2144 = vadd.f32 %v1951, %v2143
      %v2145 = vpop.f32.mrf.mxu0
      %v2146 = vadd.f32 %v1953, %v2145
      %2147 = vdwg.mxu0
      %2148 = vmatprep.subr.bf16.mxu0 0
      %2149 = vmatpush1.bf16.msra.mxu0 0
      %2150 = vmatprep.subr.bf16.mxu0 0
      %2151 = vmatpush1.bf16.msra.mxu0 0
      %2152 = vmatprep.subr.bf16.mxu0 0
      %2153 = vmatpush1.bf16.msra.mxu0 0
      %2154 = vmatprep.subr.bf16.mxu0 0
      %2155 = vmatpush1.bf16.msra.mxu0 0
      %2156 = vmatprep.subr.bf16.mxu0 0
      %2157 = vmatpush1.bf16.msra.mxu0 0
      %2158 = vmatprep.subr.bf16.mxu0 0
      %2159 = vmatpush1.bf16.msra.mxu0 0
      %2160 = vmatprep.subr.bf16.mxu0 0
      %2161 = vmatpush1.bf16.msra.mxu0 0
      %2162 = vmatprep.subr.bf16.mxu0 %v1421
      %2163 = vmatpush1.bf16.msra.mxu0 %v1420
      %2164 = vmatprep.subr.bf16.mxu0 0
      %2165 = vmatpush2.bf16.msra.mxu0 0
      %2166 = vmatprep.subr.bf16.mxu0 0
      %2167 = vmatpush2.bf16.msra.mxu0 0
      %2168 = vmatprep.subr.bf16.mxu0 0
      %2169 = vmatpush2.bf16.msra.mxu0 0
      %2170 = vmatprep.subr.bf16.mxu0 0
      %2171 = vmatpush2.bf16.msra.mxu0 0
      %2172 = vmatprep.subr.bf16.mxu0 0
      %2173 = vmatpush2.bf16.msra.mxu0 0
      %2174 = vmatprep.subr.bf16.mxu0 0
      %2175 = vmatpush2.bf16.msra.mxu0 0
      %2176 = vmatprep.subr.bf16.mxu0 0
      %2177 = vmatpush2.bf16.msra.mxu0 0
      %2178 = vmatprep.subr.bf16.mxu0 0
      %2179 = vmatpush2.bf16.msra.mxu0 0
      %2180 = vmatprep.mubr.bf16.mxu0 0
      %2181 = vmatmul.mubr.bf16.gmra.mxu0 %v1522
      %v2182 = vpop.f32.mrf.mxu0
      %v2183 = vadd.f32 %v1990, %v2182
      %v2184 = vpop.f32.mrf.mxu0
      %v2185 = vadd.f32 %v1992, %v2184
      %v2186 = vpop.f32.mrf.mxu0
      %v2187 = vadd.f32 %v1994, %v2186
      %v2188 = vpop.f32.mrf.mxu0
      %v2189 = vadd.f32 %v1996, %v2188
      %2190 = vmatprep.mubr.bf16.mxu0 0
      %2191 = vmatmul.mubr.bf16.gmra.mxu0 %v1525
      %v2192 = vpop.f32.mrf.mxu0
      %v2193 = vadd.f32 %v2000, %v2192
      %v2194 = vpop.f32.mrf.mxu0
      %v2195 = vadd.f32 %v2002, %v2194
      %v2196 = vpop.f32.mrf.mxu0
      %v2197 = vadd.f32 %v2004, %v2196
      %v2198 = vpop.f32.mrf.mxu0
      %v2199 = vadd.f32 %v2006, %v2198
      %2200 = vmatprep.mubr.bf16.mxu0 0
      %2201 = vmatmul.mubr.bf16.gmra.mxu0 %v1528
      %v2202 = vpop.f32.mrf.mxu0
      %v2203 = vadd.f32 %v2010, %v2202
      %v2204 = vpop.f32.mrf.mxu0
      %v2205 = vadd.f32 %v2012, %v2204
      %v2206 = vpop.f32.mrf.mxu0
      %v2207 = vadd.f32 %v2014, %v2206
      %v2208 = vpop.f32.mrf.mxu0
      %v2209 = vadd.f32 %v2016, %v2208
      %2210 = vmatprep.mubr.bf16.mxu0 0
      %2211 = vmatmul.mubr.bf16.gmra.mxu0 %v1531
      %v2212 = vpop.f32.mrf.mxu0
      %v2213 = vadd.f32 %v2020, %v2212
      %v2214 = vpop.f32.mrf.mxu0
      %v2215 = vadd.f32 %v2022, %v2214
      %v2216 = vpop.f32.mrf.mxu0
      %v2217 = vadd.f32 %v2024, %v2216
      %v2218 = vpop.f32.mrf.mxu0
      %v2219 = vadd.f32 %v2026, %v2218
      %2220 = vmatprep.mubr.bf16.mxu0 0
      %2221 = vmatmul.mubr.bf16.gmra.mxu0 %v1534
      %v2222 = vpop.f32.mrf.mxu0
      %v2223 = vadd.f32 %v2030, %v2222
      %v2224 = vpop.f32.mrf.mxu0
      %v2225 = vadd.f32 %v2032, %v2224
      %v2226 = vpop.f32.mrf.mxu0
      %v2227 = vadd.f32 %v2034, %v2226
      %v2228 = vpop.f32.mrf.mxu0
      %v2229 = vadd.f32 %v2036, %v2228
      %2230 = vmatprep.mubr.bf16.mxu0 0
      %2231 = vmatmul.mubr.bf16.gmra.mxu0 %v1537
      %v2232 = vpop.f32.mrf.mxu0
      %v2233 = vadd.f32 %v2040, %v2232
      %v2234 = vpop.f32.mrf.mxu0
      %v2235 = vadd.f32 %v2042, %v2234
      %v2236 = vpop.f32.mrf.mxu0
      %v2237 = vadd.f32 %v2044, %v2236
      %v2238 = vpop.f32.mrf.mxu0
      %v2239 = vadd.f32 %v2046, %v2238
      %2240 = vmatprep.mubr.bf16.mxu0 0
      %2241 = vmatmul.mubr.bf16.gmra.mxu0 %v1540
      %v2242 = vpop.f32.mrf.mxu0
      %v2243 = vadd.f32 %v2050, %v2242
      %v2244 = vpop.f32.mrf.mxu0
      %v2245 = vadd.f32 %v2052, %v2244
      %v2246 = vpop.f32.mrf.mxu0
      %v2247 = vadd.f32 %v2054, %v2246
      %v2248 = vpop.f32.mrf.mxu0
      %v2249 = vadd.f32 %v2056, %v2248
      %2250 = vmatprep.mubr.bf16.mxu0 0
      %2251 = vmatmul.mubr.bf16.gmra.mxu0 %v1543
      %v2252 = vpop.f32.mrf.mxu0
      %v2253 = vadd.f32 %v2060, %v2252
      %v2254 = vpop.f32.mrf.mxu0
      %v2255 = vadd.f32 %v2062, %v2254
      %v2256 = vpop.f32.mrf.mxu0
      %v2257 = vadd.f32 %v2064, %v2256
      %v2258 = vpop.f32.mrf.mxu0
      %v2259 = vadd.f32 %v2066, %v2258
      %2260 = vmatprep.mubr.bf16.mxu0 0
      %2261 = vmatmul.mubr.bf16.gmra.mxu0 %v1546
      %v2262 = vpop.f32.mrf.mxu0
      %v2263 = vadd.f32 %v2070, %v2262
      %v2264 = vpop.f32.mrf.mxu0
      %v2265 = vadd.f32 %v2072, %v2264
      %v2266 = vpop.f32.mrf.mxu0
      %v2267 = vadd.f32 %v2074, %v2266
      %v2268 = vpop.f32.mrf.mxu0
      %v2269 = vadd.f32 %v2076, %v2268
      %2270 = vmatprep.mubr.bf16.mxu0 0
      %2271 = vmatmul.mubr.bf16.gmra.mxu0 %v1549
      %v2272 = vpop.f32.mrf.mxu0
      %v2273 = vadd.f32 %v2080, %v2272
      %v2274 = vpop.f32.mrf.mxu0
      %v2275 = vadd.f32 %v2082, %v2274
      %v2276 = vpop.f32.mrf.mxu0
      %v2277 = vadd.f32 %v2084, %v2276
      %v2278 = vpop.f32.mrf.mxu0
      %v2279 = vadd.f32 %v2086, %v2278
      %2280 = vmatprep.mubr.bf16.mxu0 0
      %2281 = vmatmul.mubr.bf16.gmra.mxu0 %v1552
      %v2282 = vpop.f32.mrf.mxu0
      %v2283 = vadd.f32 %v2090, %v2282
      %v2284 = vpop.f32.mrf.mxu0
      %v2285 = vadd.f32 %v2092, %v2284
      %v2286 = vpop.f32.mrf.mxu0
      %v2287 = vadd.f32 %v2094, %v2286
      %v2288 = vpop.f32.mrf.mxu0
      %v2289 = vadd.f32 %v2096, %v2288
      %2290 = vmatprep.mubr.bf16.mxu0 0
      %2291 = vmatmul.mubr.bf16.gmra.mxu0 %v1555
      %v2292 = vpop.f32.mrf.mxu0
      %v2293 = vadd.f32 %v2100, %v2292
      %v2294 = vpop.f32.mrf.mxu0
      %v2295 = vadd.f32 %v2102, %v2294
      %v2296 = vpop.f32.mrf.mxu0
      %v2297 = vadd.f32 %v2104, %v2296
      %v2298 = vpop.f32.mrf.mxu0
      %v2299 = vadd.f32 %v2106, %v2298
      %2300 = vmatprep.mubr.bf16.mxu0 0
      %2301 = vmatmul.mubr.bf16.gmra.mxu0 %v1558
      %v2302 = vpop.f32.mrf.mxu0
      %v2303 = vadd.f32 %v2110, %v2302
      %v2304 = vpop.f32.mrf.mxu0
      %v2305 = vadd.f32 %v2112, %v2304
      %v2306 = vpop.f32.mrf.mxu0
      %v2307 = vadd.f32 %v2114, %v2306
      %v2308 = vpop.f32.mrf.mxu0
      %v2309 = vadd.f32 %v2116, %v2308
      %2310 = vmatprep.mubr.bf16.mxu0 0
      %2311 = vmatmul.mubr.bf16.gmra.mxu0 %v1561
      %v2312 = vpop.f32.mrf.mxu0
      %v2313 = vadd.f32 %v2120, %v2312
      %v2314 = vpop.f32.mrf.mxu0
      %v2315 = vadd.f32 %v2122, %v2314
      %v2316 = vpop.f32.mrf.mxu0
      %v2317 = vadd.f32 %v2124, %v2316
      %v2318 = vpop.f32.mrf.mxu0
      %v2319 = vadd.f32 %v2126, %v2318
      %2320 = vmatprep.mubr.bf16.mxu0 0
      %2321 = vmatmul.mubr.bf16.gmra.mxu0 %v1564
      %v2322 = vpop.f32.mrf.mxu0
      %v2323 = vadd.f32 %v2130, %v2322
      %v2324 = vpop.f32.mrf.mxu0
      %v2325 = vadd.f32 %v2132, %v2324
      %v2326 = vpop.f32.mrf.mxu0
      %v2327 = vadd.f32 %v2134, %v2326
      %v2328 = vpop.f32.mrf.mxu0
      %v2329 = vadd.f32 %v2136, %v2328
      %2330 = vmatprep.mubr.bf16.mxu0 0
      %2331 = vmatmul.mubr.bf16.gmra.mxu0 %v1567
      %v2332 = vpop.f32.mrf.mxu0
      %v2333 = vadd.f32 %v2140, %v2332
      %v2334 = vpop.f32.mrf.mxu0
      %v2335 = vadd.f32 %v2142, %v2334
      %v2336 = vpop.f32.mrf.mxu0
      %v2337 = vadd.f32 %v2144, %v2336
      %v2338 = vpop.f32.mrf.mxu0
      %v2339 = vadd.f32 %v2146, %v2338
      %2340 = vdwg.mxu0
      %v2341 = vmax.f32 %v2183, 0.0
      %v2342 = vmax.f32 %v2185, 0.0
      %v2343 = vmax.f32 %v2187, 0.0
      %v2344 = vmax.f32 %v2189, 0.0
      %v2345 = vmax.f32 %v2193, 0.0
      %v2346 = vmax.f32 %v2195, 0.0
      %v2347 = vmax.f32 %v2197, 0.0
      %v2348 = vmax.f32 %v2199, 0.0
      %v2349 = vmax.f32 %v2203, 0.0
      %v2350 = vmax.f32 %v2205, 0.0
      %v2351 = vmax.f32 %v2207, 0.0
      %v2352 = vmax.f32 %v2209, 0.0
      %v2353 = vmax.f32 %v2213, 0.0
      %v2354 = vmax.f32 %v2215, 0.0
      %v2355 = vmax.f32 %v2217, 0.0
      %v2356 = vmax.f32 %v2219, 0.0
      %v2357 = vmax.f32 %v2223, 0.0
      %v2358 = vmax.f32 %v2225, 0.0
      %v2359 = vmax.f32 %v2227, 0.0
      %v2360 = vmax.f32 %v2229, 0.0
      %v2361 = vmax.f32 %v2233, 0.0
      %v2362 = vmax.f32 %v2235, 0.0
      %v2363 = vmax.f32 %v2237, 0.0
      %v2364 = vmax.f32 %v2239, 0.0
      %v2365 = vmax.f32 %v2243, 0.0
      %v2366 = vmax.f32 %v2245, 0.0
      %v2367 = vmax.f32 %v2247, 0.0
      %v2368 = vmax.f32 %v2249, 0.0
      %v2369 = vmax.f32 %v2253, 0.0
      %v2370 = vmax.f32 %v2255, 0.0
      %v2371 = vmax.f32 %v2257, 0.0
      %v2372 = vmax.f32 %v2259, 0.0
      %v2373 = vmax.f32 %v2263, 0.0
      %v2374 = vmax.f32 %v2265, 0.0
      %v2375 = vmax.f32 %v2267, 0.0
      %v2376 = vmax.f32 %v2269, 0.0
      %v2377 = vmax.f32 %v2273, 0.0
      %v2378 = vmax.f32 %v2275, 0.0
      %v2379 = vmax.f32 %v2277, 0.0
      %v2380 = vmax.f32 %v2279, 0.0
      %v2381 = vmax.f32 %v2283, 0.0
      %v2382 = vmax.f32 %v2285, 0.0
      %v2383 = vmax.f32 %v2287, 0.0
      %v2384 = vmax.f32 %v2289, 0.0
      %v2385 = vmax.f32 %v2293, 0.0
      %v2386 = vmax.f32 %v2295, 0.0
      %v2387 = vmax.f32 %v2297, 0.0
      %v2388 = vmax.f32 %v2299, 0.0
      %v2389 = vmax.f32 %v2303, 0.0
      %v2390 = vmax.f32 %v2305, 0.0
      %v2391 = vmax.f32 %v2307, 0.0
      %v2392 = vmax.f32 %v2309, 0.0
      %v2393 = vmax.f32 %v2313, 0.0
      %v2394 = vmax.f32 %v2315, 0.0
      %v2395 = vmax.f32 %v2317, 0.0
      %v2396 = vmax.f32 %v2319, 0.0
      %v2397 = vmax.f32 %v2323, 0.0
      %v2398 = vmax.f32 %v2325, 0.0
      %v2399 = vmax.f32 %v2327, 0.0
      %v2400 = vmax.f32 %v2329, 0.0
      %v2401 = vmax.f32 %v2333, 0.0
      %v2402 = vmax.f32 %v2335, 0.0
      %v2403 = vmax.f32 %v2337, 0.0
      %v2404 = vmax.f32 %v2339, 0.0
      %v2405 = vpack.c.bf16 %v2343, %v2341
      %v2406 = vpack.c.bf16 %v2344, %v2342
      %v2407 = vpack.c.bf16 %v2347, %v2345
      %v2408 = vpack.c.bf16 %v2348, %v2346
      %v2409 = vpack.c.bf16 %v2351, %v2349
      %v2410 = vpack.c.bf16 %v2352, %v2350
      %v2411 = vpack.c.bf16 %v2355, %v2353
      %v2412 = vpack.c.bf16 %v2356, %v2354
      %v2413 = vpack.c.bf16 %v2359, %v2357
      %v2414 = vpack.c.bf16 %v2360, %v2358
      %v2415 = vpack.c.bf16 %v2363, %v2361
      %v2416 = vpack.c.bf16 %v2364, %v2362
      %v2417 = vpack.c.bf16 %v2367, %v2365
      %v2418 = vpack.c.bf16 %v2368, %v2366
      %v2419 = vpack.c.bf16 %v2371, %v2369
      %v2420 = vpack.c.bf16 %v2372, %v2370
      %v2421 = vpack.c.bf16 %v2375, %v2373
      %v2422 = vpack.c.bf16 %v2376, %v2374
      %v2423 = vpack.c.bf16 %v2379, %v2377
      %v2424 = vpack.c.bf16 %v2380, %v2378
      %v2425 = vpack.c.bf16 %v2383, %v2381
      %v2426 = vpack.c.bf16 %v2384, %v2382
      %v2427 = vpack.c.bf16 %v2387, %v2385
      %v2428 = vpack.c.bf16 %v2388, %v2386
      %v2429 = vpack.c.bf16 %v2391, %v2389
      %v2430 = vpack.c.bf16 %v2392, %v2390
      %v2431 = vpack.c.bf16 %v2395, %v2393
      %v2432 = vpack.c.bf16 %v2396, %v2394
      %v2433 = vpack.c.bf16 %v2399, %v2397
      %v2434 = vpack.c.bf16 %v2400, %v2398
      %v2435 = vpack.c.bf16 %v2403, %v2401
      %v2436 = vpack.c.bf16 %v2404, %v2402
      %v2437 = vld [vmem:[%s3] sm:$0xf]
      %v2438 = vld [vmem:[%s3 + $0x4] sm:$0xf]
      %v2439 = vld [vmem:[%s3 + $0x8] sm:$0xf]
      %v2440 = vld [vmem:[%s3 + $0xc] sm:$0xf]
      %v2441 = vld [vmem:[%s3 + $0x10] sm:$0xf]
      %v2442 = vld [vmem:[%s3 + $0x14] sm:$0xf]
      %v2443 = vld [vmem:[%s3 + $0x18] sm:$0xf]
      %v2444 = vld [vmem:[%s3 + $0x1c] sm:$0xf]
      %v2445 = vld [vmem:[%s3 + $0x20] sm:$0xf]
      %v2446 = vld [vmem:[%s3 + $0x24] sm:$0xf]
      %v2447 = vld [vmem:[%s3 + $0x28] sm:$0xf]
      %v2448 = vld [vmem:[%s3 + $0x2c] sm:$0xf]
      %v2449 = vld [vmem:[%s3 + $0x30] sm:$0xf]
      %v2450 = vld [vmem:[%s3 + $0x34] sm:$0xf]
      %v2451 = vld [vmem:[%s3 + $0x38] sm:$0xf]
      %v2452 = vld [vmem:[%s3 + $0x3c] sm:$0xf]
      %v2453 = vld [vmem:[%s3 + $0x40] sm:$0xf]
      %v2454 = vld [vmem:[%s3 + $0x44] sm:$0xf]
      %v2455 = vld [vmem:[%s3 + $0x48] sm:$0xf]
      %v2456 = vld [vmem:[%s3 + $0x4c] sm:$0xf]
      %v2457 = vld [vmem:[%s3 + $0x50] sm:$0xf]
      %v2458 = vld [vmem:[%s3 + $0x54] sm:$0xf]
      %v2459 = vld [vmem:[%s3 + $0x58] sm:$0xf]
      %v2460 = vld [vmem:[%s3 + $0x5c] sm:$0xf]
      %v2461 = vld [vmem:[%s3 + $0x60] sm:$0xf]
      %v2462 = vld [vmem:[%s4] sm:$0x1]
      %v2464 = vlaneseq
      %v2465 = vshrl.u32 %v2464, 7
      %v2466 = vsub.s32 0, %v2465
      %v2467 = vrot.slane %v2462, %v2466
      %v2494 = vunpack.c.l.b16 %v2437
      %v2495 = vunpack.c.l.b16 %v2438
      %v2496 = vunpack.c.l.b16 %v2439
      %v2497 = vunpack.c.l.b16 %v2440
      %v2498 = vunpack.c.l.b16 %v2441
      %v2499 = vunpack.c.l.b16 %v2442
      %v2500 = vunpack.c.l.b16 %v2443
      %v2501 = vunpack.c.l.b16 %v2444
      %v2502 = vunpack.c.l.b16 %v2445
      %v2503 = vunpack.c.l.b16 %v2446
      %v2504 = vunpack.c.l.b16 %v2447
      %v2505 = vunpack.c.l.b16 %v2448
      %v2506 = vunpack.c.l.b16 %v2449
      %v2507 = vunpack.c.l.b16 %v2450
      %v2508 = vunpack.c.l.b16 %v2451
      %v2509 = vunpack.c.l.b16 %v2452
      %v2510 = vunpack.c.l.b16 %v2453
      %v2511 = vunpack.c.l.b16 %v2454
      %v2512 = vunpack.c.l.b16 %v2455
      %v2513 = vunpack.c.l.b16 %v2456
      %v2514 = vunpack.c.l.b16 %v2457
      %v2515 = vunpack.c.l.b16 %v2458
      %v2516 = vunpack.c.l.b16 %v2459
      %v2517 = vunpack.c.l.b16 %v2460
      %v2518 = vunpack.c.l.b16 %v2461
      %v2519 = vpack.c.b16 %v2495, %v2494
      %v2520 = vpack.c.b16 %v2497, %v2496
      %v2521 = vpack.c.b16 %v2499, %v2498
      %v2522 = vpack.c.b16 %v2501, %v2500
      %v2523 = vpack.c.b16 %v2503, %v2502
      %v2524 = vpack.c.b16 %v2505, %v2504
      %v2525 = vpack.c.b16 %v2507, %v2506
      %v2526 = vpack.c.b16 %v2509, %v2508
      %v2527 = vpack.c.b16 %v2511, %v2510
      %v2528 = vpack.c.b16 %v2513, %v2512
      %v2529 = vpack.c.b16 %v2515, %v2514
      %v2530 = vpack.c.b16 %v2517, %v2516
      %v2531 = vpack.c.b16 %v2518, %v2518
      %vm2544 = vcmask 588800
      %v2546 = vsel %vm2544, %v2406, 0
      %v2549 = vsel %vm2544, %v2408, 0
      %v2552 = vsel %vm2544, %v2410, 0
      %v2555 = vsel %vm2544, %v2412, 0
      %v2558 = vsel %vm2544, %v2414, 0
      %v2561 = vsel %vm2544, %v2416, 0
      %v2564 = vsel %vm2544, %v2418, 0
      %v2567 = vsel %vm2544, %v2420, 0
      %v2570 = vsel %vm2544, %v2422, 0
      %v2573 = vsel %vm2544, %v2424, 0
      %v2576 = vsel %vm2544, %v2426, 0
      %v2579 = vsel %vm2544, %v2428, 0
      %v2582 = vsel %vm2544, %v2430, 0
      %v2585 = vsel %vm2544, %v2432, 0
      %v2588 = vsel %vm2544, %v2434, 0
      %v2591 = vsel %vm2544, %v2436, 0
      %vm2593 = vcmask 1043456
      %v2595 = vsel %vm2593, %v2531, 0
      %2597 = vmatprep.subr.bf16.mxu0 0
      %2598 = vmatpush1.bf16.msra.mxu0 %v2526
      %2599 = vmatprep.subr.bf16.mxu0 0
      %2600 = vmatpush1.bf16.msra.mxu0 %v2525
      %2601 = vmatprep.subr.bf16.mxu0 0
      %2602 = vmatpush1.bf16.msra.mxu0 %v2524
      %2603 = vmatprep.subr.bf16.mxu0 0
      %2604 = vmatpush1.bf16.msra.mxu0 %v2523
      %2605 = vmatprep.subr.bf16.mxu0 0
      %2606 = vmatpush1.bf16.msra.mxu0 %v2522
      %2607 = vmatprep.subr.bf16.mxu0 0
      %2608 = vmatpush1.bf16.msra.mxu0 %v2521
      %2609 = vmatprep.subr.bf16.mxu0 0
      %2610 = vmatpush1.bf16.msra.mxu0 %v2520
      %2611 = vmatprep.subr.bf16.mxu0 0
      %2612 = vmatpush1.bf16.msra.mxu0 %v2519
      %2613 = vmatprep.subr.bf16.mxu0 0
      %2614 = vmatpush2.bf16.msra.mxu0 0
      %2615 = vmatprep.subr.bf16.mxu0 0
      %2616 = vmatpush2.bf16.msra.mxu0 0
      %2617 = vmatprep.subr.bf16.mxu0 0
      %2618 = vmatpush2.bf16.msra.mxu0 0
      %2619 = vmatprep.subr.bf16.mxu0 0
      %2620 = vmatpush2.bf16.msra.mxu0 %v2595
      %2621 = vmatprep.subr.bf16.mxu0 0
      %2622 = vmatpush2.bf16.msra.mxu0 %v2530
      %2623 = vmatprep.subr.bf16.mxu0 0
      %2624 = vmatpush2.bf16.msra.mxu0 %v2529
      %2625 = vmatprep.subr.bf16.mxu0 0
      %2626 = vmatpush2.bf16.msra.mxu0 %v2528
      %2627 = vmatprep.subr.bf16.mxu0 0
      %2628 = vmatpush2.bf16.msra.mxu0 %v2527
      %2629 = vmatprep.mubr.bf16.mxu0 %v2546
      %2630 = vmatmul.mubr.bf16.gmra.mxu0 %v2405
      %v2631 = vpop.f32.mrf.mxu0
      %v2632 = vadd.f32 %v2467, %v2631
      %v2633 = vpop.f32.mrf.mxu0
      %v2634 = vpop.f32.mrf.mxu0
      %v2635 = vadd.f32 %v2467, %v2634
      %v2636 = vpop.f32.mrf.mxu0
      %2637 = vmatprep.mubr.bf16.mxu0 %v2549
      %2638 = vmatmul.mubr.bf16.gmra.mxu0 %v2407
      %v2639 = vpop.f32.mrf.mxu0
      %v2640 = vadd.f32 %v2467, %v2639
      %v2641 = vpop.f32.mrf.mxu0
      %v2642 = vpop.f32.mrf.mxu0
      %v2643 = vadd.f32 %v2467, %v2642
      %v2644 = vpop.f32.mrf.mxu0
      %2645 = vmatprep.mubr.bf16.mxu0 %v2552
      %2646 = vmatmul.mubr.bf16.gmra.mxu0 %v2409
      %v2647 = vpop.f32.mrf.mxu0
      %v2648 = vadd.f32 %v2467, %v2647
      %v2649 = vpop.f32.mrf.mxu0
      %v2650 = vpop.f32.mrf.mxu0
      %v2651 = vadd.f32 %v2467, %v2650
      %v2652 = vpop.f32.mrf.mxu0
      %2653 = vmatprep.mubr.bf16.mxu0 %v2555
      %2654 = vmatmul.mubr.bf16.gmra.mxu0 %v2411
      %v2655 = vpop.f32.mrf.mxu0
      %v2656 = vadd.f32 %v2467, %v2655
      %v2657 = vpop.f32.mrf.mxu0
      %v2658 = vpop.f32.mrf.mxu0
      %v2659 = vadd.f32 %v2467, %v2658
      %v2660 = vpop.f32.mrf.mxu0
      %2661 = vmatprep.mubr.bf16.mxu0 %v2558
      %2662 = vmatmul.mubr.bf16.gmra.mxu0 %v2413
      %v2663 = vpop.f32.mrf.mxu0
      %v2664 = vadd.f32 %v2467, %v2663
      %v2665 = vpop.f32.mrf.mxu0
      %v2666 = vpop.f32.mrf.mxu0
      %v2667 = vadd.f32 %v2467, %v2666
      %v2668 = vpop.f32.mrf.mxu0
      %2669 = vmatprep.mubr.bf16.mxu0 %v2561
      %2670 = vmatmul.mubr.bf16.gmra.mxu0 %v2415
      %v2671 = vpop.f32.mrf.mxu0
      %v2672 = vadd.f32 %v2467, %v2671
      %v2673 = vpop.f32.mrf.mxu0
      %v2674 = vpop.f32.mrf.mxu0
      %v2675 = vadd.f32 %v2467, %v2674
      %v2676 = vpop.f32.mrf.mxu0
      %2677 = vmatprep.mubr.bf16.mxu0 %v2564
      %2678 = vmatmul.mubr.bf16.gmra.mxu0 %v2417
      %v2679 = vpop.f32.mrf.mxu0
      %v2680 = vadd.f32 %v2467, %v2679
      %v2681 = vpop.f32.mrf.mxu0
      %v2682 = vpop.f32.mrf.mxu0
      %v2683 = vadd.f32 %v2467, %v2682
      %v2684 = vpop.f32.mrf.mxu0
      %2685 = vmatprep.mubr.bf16.mxu0 %v2567
      %2686 = vmatmul.mubr.bf16.gmra.mxu0 %v2419
      %v2687 = vpop.f32.mrf.mxu0
      %v2688 = vadd.f32 %v2467, %v2687
      %v2689 = vpop.f32.mrf.mxu0
      %v2690 = vpop.f32.mrf.mxu0
      %v2691 = vadd.f32 %v2467, %v2690
      %v2692 = vpop.f32.mrf.mxu0
      %2693 = vmatprep.mubr.bf16.mxu0 %v2570
      %2694 = vmatmul.mubr.bf16.gmra.mxu0 %v2421
      %v2695 = vpop.f32.mrf.mxu0
      %v2696 = vadd.f32 %v2467, %v2695
      %v2697 = vpop.f32.mrf.mxu0
      %v2698 = vpop.f32.mrf.mxu0
      %v2699 = vadd.f32 %v2467, %v2698
      %v2700 = vpop.f32.mrf.mxu0
      %2701 = vmatprep.mubr.bf16.mxu0 %v2573
      %2702 = vmatmul.mubr.bf16.gmra.mxu0 %v2423
      %v2703 = vpop.f32.mrf.mxu0
      %v2704 = vadd.f32 %v2467, %v2703
      %v2705 = vpop.f32.mrf.mxu0
      %v2706 = vpop.f32.mrf.mxu0
      %v2707 = vadd.f32 %v2467, %v2706
      %v2708 = vpop.f32.mrf.mxu0
      %2709 = vmatprep.mubr.bf16.mxu0 %v2576
      %2710 = vmatmul.mubr.bf16.gmra.mxu0 %v2425
      %v2711 = vpop.f32.mrf.mxu0
      %v2712 = vadd.f32 %v2467, %v2711
      %v2713 = vpop.f32.mrf.mxu0
      %v2714 = vpop.f32.mrf.mxu0
      %v2715 = vadd.f32 %v2467, %v2714
      %v2716 = vpop.f32.mrf.mxu0
      %2717 = vmatprep.mubr.bf16.mxu0 %v2579
      %2718 = vmatmul.mubr.bf16.gmra.mxu0 %v2427
      %v2719 = vpop.f32.mrf.mxu0
      %v2720 = vadd.f32 %v2467, %v2719
      %v2721 = vpop.f32.mrf.mxu0
      %v2722 = vpop.f32.mrf.mxu0
      %v2723 = vadd.f32 %v2467, %v2722
      %v2724 = vpop.f32.mrf.mxu0
      %2725 = vmatprep.mubr.bf16.mxu0 %v2582
      %2726 = vmatmul.mubr.bf16.gmra.mxu0 %v2429
      %v2727 = vpop.f32.mrf.mxu0
      %v2728 = vadd.f32 %v2467, %v2727
      %v2729 = vpop.f32.mrf.mxu0
      %v2730 = vpop.f32.mrf.mxu0
      %v2731 = vadd.f32 %v2467, %v2730
      %v2732 = vpop.f32.mrf.mxu0
      %2733 = vmatprep.mubr.bf16.mxu0 %v2585
      %2734 = vmatmul.mubr.bf16.gmra.mxu0 %v2431
      %v2735 = vpop.f32.mrf.mxu0
      %v2736 = vadd.f32 %v2467, %v2735
      %v2737 = vpop.f32.mrf.mxu0
      %v2738 = vpop.f32.mrf.mxu0
      %v2739 = vadd.f32 %v2467, %v2738
      %v2740 = vpop.f32.mrf.mxu0
      %2741 = vmatprep.mubr.bf16.mxu0 %v2588
      %2742 = vmatmul.mubr.bf16.gmra.mxu0 %v2433
      %v2743 = vpop.f32.mrf.mxu0
      %v2744 = vadd.f32 %v2467, %v2743
      %v2745 = vpop.f32.mrf.mxu0
      %v2746 = vpop.f32.mrf.mxu0
      %v2747 = vadd.f32 %v2467, %v2746
      %v2748 = vpop.f32.mrf.mxu0
      %2749 = vmatprep.mubr.bf16.mxu0 %v2591
      %2750 = vmatmul.mubr.bf16.gmra.mxu0 %v2435
      %v2751 = vpop.f32.mrf.mxu0
      %v2752 = vadd.f32 %v2467, %v2751
      %v2753 = vpop.f32.mrf.mxu0
      %v2754 = vpop.f32.mrf.mxu0
      %v2755 = vadd.f32 %v2467, %v2754
      %v2756 = vpop.f32.mrf.mxu0
      %2757 = vdwg.mxu0
      %2758 = vmax.xlane.f32.xlu0 %v2632
      %v2759 = vpop.xlane.xlu0 %2758
      %2760 = vmax.xlane.f32.xlu0 %v2635
      %v2761 = vpop.xlane.xlu0 %2760
      %2762 = vmax.xlane.f32.xlu0 %v2640
      %v2763 = vpop.xlane.xlu0 %2762
      %2764 = vmax.xlane.f32.xlu0 %v2643
      %v2765 = vpop.xlane.xlu0 %2764
      %2766 = vmax.xlane.f32.xlu0 %v2648
      %v2767 = vpop.xlane.xlu0 %2766
      %2768 = vmax.xlane.f32.xlu0 %v2651
      %v2769 = vpop.xlane.xlu0 %2768
      %2770 = vmax.xlane.f32.xlu0 %v2656
      %v2771 = vpop.xlane.xlu0 %2770
      %2772 = vmax.xlane.f32.xlu0 %v2659
      %v2773 = vpop.xlane.xlu0 %2772
      %2774 = vmax.xlane.f32.xlu0 %v2664
      %v2775 = vpop.xlane.xlu0 %2774
      %2776 = vmax.xlane.f32.xlu0 %v2667
      %v2777 = vpop.xlane.xlu0 %2776
      %2778 = vmax.xlane.f32.xlu0 %v2672
      %v2779 = vpop.xlane.xlu0 %2778
      %2780 = vmax.xlane.f32.xlu0 %v2675
      %v2781 = vpop.xlane.xlu0 %2780
      %2782 = vmax.xlane.f32.xlu0 %v2680
      %v2783 = vpop.xlane.xlu0 %2782
      %2784 = vmax.xlane.f32.xlu0 %v2683
      %v2785 = vpop.xlane.xlu0 %2784
      %2786 = vmax.xlane.f32.xlu0 %v2688
      %v2787 = vpop.xlane.xlu0 %2786
      %2788 = vmax.xlane.f32.xlu0 %v2691
      %v2789 = vpop.xlane.xlu0 %2788
      %2790 = vmax.xlane.f32.xlu0 %v2696
      %v2791 = vpop.xlane.xlu0 %2790
      %2792 = vmax.xlane.f32.xlu0 %v2699
      %v2793 = vpop.xlane.xlu0 %2792
      %2794 = vmax.xlane.f32.xlu0 %v2704
      %v2795 = vpop.xlane.xlu0 %2794
      %2796 = vmax.xlane.f32.xlu0 %v2707
      %v2797 = vpop.xlane.xlu0 %2796
      %2798 = vmax.xlane.f32.xlu0 %v2712
      %v2799 = vpop.xlane.xlu0 %2798
      %2800 = vmax.xlane.f32.xlu0 %v2715
      %v2801 = vpop.xlane.xlu0 %2800
      %2802 = vmax.xlane.f32.xlu0 %v2720
      %v2803 = vpop.xlane.xlu0 %2802
      %2804 = vmax.xlane.f32.xlu0 %v2723
      %v2805 = vpop.xlane.xlu0 %2804
      %2806 = vmax.xlane.f32.xlu0 %v2728
      %v2807 = vpop.xlane.xlu0 %2806
      %2808 = vmax.xlane.f32.xlu0 %v2731
      %v2809 = vpop.xlane.xlu0 %2808
      %2810 = vmax.xlane.f32.xlu0 %v2736
      %v2811 = vpop.xlane.xlu0 %2810
      %2812 = vmax.xlane.f32.xlu0 %v2739
      %v2813 = vpop.xlane.xlu0 %2812
      %2814 = vmax.xlane.f32.xlu0 %v2744
      %v2815 = vpop.xlane.xlu0 %2814
      %2816 = vmax.xlane.f32.xlu0 %v2747
      %v2817 = vpop.xlane.xlu0 %2816
      %2818 = vmax.xlane.f32.xlu0 %v2752
      %v2819 = vpop.xlane.xlu0 %2818
      %2820 = vmax.xlane.f32.xlu0 %v2755
      %v2821 = vpop.xlane.xlu0 %2820
      %v2822 = vsub.f32 %v2632, %v2759
      %v2823 = vsub.f32 %v2635, %v2761
      %v2824 = vsub.f32 %v2640, %v2763
      %v2825 = vsub.f32 %v2643, %v2765
      %v2826 = vsub.f32 %v2648, %v2767
      %v2827 = vsub.f32 %v2651, %v2769
      %v2828 = vsub.f32 %v2656, %v2771
      %v2829 = vsub.f32 %v2659, %v2773
      %v2830 = vsub.f32 %v2664, %v2775
      %v2831 = vsub.f32 %v2667, %v2777
      %v2832 = vsub.f32 %v2672, %v2779
      %v2833 = vsub.f32 %v2675, %v2781
      %v2834 = vsub.f32 %v2680, %v2783
      %v2835 = vsub.f32 %v2683, %v2785
      %v2836 = vsub.f32 %v2688, %v2787
      %v2837 = vsub.f32 %v2691, %v2789
      %v2838 = vsub.f32 %v2696, %v2791
      %v2839 = vsub.f32 %v2699, %v2793
      %v2840 = vsub.f32 %v2704, %v2795
      %v2841 = vsub.f32 %v2707, %v2797
      %v2842 = vsub.f32 %v2712, %v2799
      %v2843 = vsub.f32 %v2715, %v2801
      %v2844 = vsub.f32 %v2720, %v2803
      %v2845 = vsub.f32 %v2723, %v2805
      %v2846 = vsub.f32 %v2728, %v2807
      %v2847 = vsub.f32 %v2731, %v2809
      %v2848 = vsub.f32 %v2736, %v2811
      %v2849 = vsub.f32 %v2739, %v2813
      %v2850 = vsub.f32 %v2744, %v2815
      %v2851 = vsub.f32 %v2747, %v2817
      %v2852 = vsub.f32 %v2752, %v2819
      %v2853 = vsub.f32 %v2755, %v2821
      %v2854 = vmul.f32 %v2822, 1.442695
      %v2855 = vpow.pop %v2854
      %v2856 = vmul.f32 %v2823, 1.442695
      %v2857 = vpow.pop %v2856
      %v2858 = vmul.f32 %v2824, 1.442695
      %v2859 = vpow.pop %v2858
      %v2860 = vmul.f32 %v2825, 1.442695
      %v2861 = vpow.pop %v2860
      %v2862 = vmul.f32 %v2826, 1.442695
      %v2863 = vpow.pop %v2862
      %v2864 = vmul.f32 %v2827, 1.442695
      %v2865 = vpow.pop %v2864
      %v2866 = vmul.f32 %v2828, 1.442695
      %v2867 = vpow.pop %v2866
      %v2868 = vmul.f32 %v2829, 1.442695
      %v2869 = vpow.pop %v2868
      %v2870 = vmul.f32 %v2830, 1.442695
      %v2871 = vpow.pop %v2870
      %v2872 = vmul.f32 %v2831, 1.442695
      %v2873 = vpow.pop %v2872
      %v2874 = vmul.f32 %v2832, 1.442695
      %v2875 = vpow.pop %v2874
      %v2876 = vmul.f32 %v2833, 1.442695
      %v2877 = vpow.pop %v2876
      %v2878 = vmul.f32 %v2834, 1.442695
      %v2879 = vpow.pop %v2878
      %v2880 = vmul.f32 %v2835, 1.442695
      %v2881 = vpow.pop %v2880
      %v2882 = vmul.f32 %v2836, 1.442695
      %v2883 = vpow.pop %v2882
      %v2884 = vmul.f32 %v2837, 1.442695
      %v2885 = vpow.pop %v2884
      %v2886 = vmul.f32 %v2838, 1.442695
      %v2887 = vpow.pop %v2886
      %v2888 = vmul.f32 %v2839, 1.442695
      %v2889 = vpow.pop %v2888
      %v2890 = vmul.f32 %v2840, 1.442695
      %v2891 = vpow.pop %v2890
      %v2892 = vmul.f32 %v2841, 1.442695
      %v2893 = vpow.pop %v2892
      %v2894 = vmul.f32 %v2842, 1.442695
      %v2895 = vpow.pop %v2894
      %v2896 = vmul.f32 %v2843, 1.442695
      %v2897 = vpow.pop %v2896
      %v2898 = vmul.f32 %v2844, 1.442695
      %v2899 = vpow.pop %v2898
      %v2900 = vmul.f32 %v2845, 1.442695
      %v2901 = vpow.pop %v2900
      %v2902 = vmul.f32 %v2846, 1.442695
      %v2903 = vpow.pop %v2902
      %v2904 = vmul.f32 %v2847, 1.442695
      %v2905 = vpow.pop %v2904
      %v2906 = vmul.f32 %v2848, 1.442695
      %v2907 = vpow.pop %v2906
      %v2908 = vmul.f32 %v2849, 1.442695
      %v2909 = vpow.pop %v2908
      %v2910 = vmul.f32 %v2850, 1.442695
      %v2911 = vpow.pop %v2910
      %v2912 = vmul.f32 %v2851, 1.442695
      %v2913 = vpow.pop %v2912
      %v2914 = vmul.f32 %v2852, 1.442695
      %v2915 = vpow.pop %v2914
      %v2916 = vmul.f32 %v2853, 1.442695
      %v2917 = vpow.pop %v2916
      %2918 = vadd.xlane.f32.xlu0 %v2855
      %v2919 = vpop.xlane.xlu0 %2918
      %2920 = vadd.xlane.f32.xlu0 %v2857
      %v2921 = vpop.xlane.xlu0 %2920
      %2922 = vadd.xlane.f32.xlu0 %v2859
      %v2923 = vpop.xlane.xlu0 %2922
      %2924 = vadd.xlane.f32.xlu0 %v2861
      %v2925 = vpop.xlane.xlu0 %2924
      %2926 = vadd.xlane.f32.xlu0 %v2863
      %v2927 = vpop.xlane.xlu0 %2926
      %2928 = vadd.xlane.f32.xlu0 %v2865
      %v2929 = vpop.xlane.xlu0 %2928
      %2930 = vadd.xlane.f32.xlu0 %v2867
      %v2931 = vpop.xlane.xlu0 %2930
      %2932 = vadd.xlane.f32.xlu0 %v2869
      %v2933 = vpop.xlane.xlu0 %2932
      %2934 = vadd.xlane.f32.xlu0 %v2871
      %v2935 = vpop.xlane.xlu0 %2934
      %2936 = vadd.xlane.f32.xlu0 %v2873
      %v2937 = vpop.xlane.xlu0 %2936
      %2938 = vadd.xlane.f32.xlu0 %v2875
      %v2939 = vpop.xlane.xlu0 %2938
      %2940 = vadd.xlane.f32.xlu0 %v2877
      %v2941 = vpop.xlane.xlu0 %2940
      %2942 = vadd.xlane.f32.xlu0 %v2879
      %v2943 = vpop.xlane.xlu0 %2942
      %2944 = vadd.xlane.f32.xlu0 %v2881
      %v2945 = vpop.xlane.xlu0 %2944
      %2946 = vadd.xlane.f32.xlu0 %v2883
      %v2947 = vpop.xlane.xlu0 %2946
      %2948 = vadd.xlane.f32.xlu0 %v2885
      %v2949 = vpop.xlane.xlu0 %2948
      %2950 = vadd.xlane.f32.xlu0 %v2887
      %v2951 = vpop.xlane.xlu0 %2950
      %2952 = vadd.xlane.f32.xlu0 %v2889
      %v2953 = vpop.xlane.xlu0 %2952
      %2954 = vadd.xlane.f32.xlu0 %v2891
      %v2955 = vpop.xlane.xlu0 %2954
      %2956 = vadd.xlane.f32.xlu0 %v2893
      %v2957 = vpop.xlane.xlu0 %2956
      %2958 = vadd.xlane.f32.xlu0 %v2895
      %v2959 = vpop.xlane.xlu0 %2958
      %2960 = vadd.xlane.f32.xlu0 %v2897
      %v2961 = vpop.xlane.xlu0 %2960
      %2962 = vadd.xlane.f32.xlu0 %v2899
      %v2963 = vpop.xlane.xlu0 %2962
      %2964 = vadd.xlane.f32.xlu0 %v2901
      %v2965 = vpop.xlane.xlu0 %2964
      %2966 = vadd.xlane.f32.xlu0 %v2903
      %v2967 = vpop.xlane.xlu0 %2966
      %2968 = vadd.xlane.f32.xlu0 %v2905
      %v2969 = vpop.xlane.xlu0 %2968
      %2970 = vadd.xlane.f32.xlu0 %v2907
      %v2971 = vpop.xlane.xlu0 %2970
      %2972 = vadd.xlane.f32.xlu0 %v2909
      %v2973 = vpop.xlane.xlu0 %2972
      %2974 = vadd.xlane.f32.xlu0 %v2911
      %v2975 = vpop.xlane.xlu0 %2974
      %2976 = vadd.xlane.f32.xlu0 %v2913
      %v2977 = vpop.xlane.xlu0 %2976
      %2978 = vadd.xlane.f32.xlu0 %v2915
      %v2979 = vpop.xlane.xlu0 %2978
      %2980 = vadd.xlane.f32.xlu0 %v2917
      %v2981 = vpop.xlane.xlu0 %2980
      %v2982 = vlog2.pop %v2919
      %v2983 = vmul.f32 %v2982, 0.6931472
      %v2984 = vlog2.pop %v2921
      %v2985 = vmul.f32 %v2984, 0.6931472
      %v2986 = vlog2.pop %v2923
      %v2987 = vmul.f32 %v2986, 0.6931472
      %v2988 = vlog2.pop %v2925
      %v2989 = vmul.f32 %v2988, 0.6931472
      %v2990 = vlog2.pop %v2927
      %v2991 = vmul.f32 %v2990, 0.6931472
      %v2992 = vlog2.pop %v2929
      %v2993 = vmul.f32 %v2992, 0.6931472
      %v2994 = vlog2.pop %v2931
      %v2995 = vmul.f32 %v2994, 0.6931472
      %v2996 = vlog2.pop %v2933
      %v2997 = vmul.f32 %v2996, 0.6931472
      %v2998 = vlog2.pop %v2935
      %v2999 = vmul.f32 %v2998, 0.6931472
      %v3000 = vlog2.pop %v2937
      %v3001 = vmul.f32 %v3000, 0.6931472
      %v3002 = vlog2.pop %v2939
      %v3003 = vmul.f32 %v3002, 0.6931472
      %v3004 = vlog2.pop %v2941
      %v3005 = vmul.f32 %v3004, 0.6931472
      %v3006 = vlog2.pop %v2943
      %v3007 = vmul.f32 %v3006, 0.6931472
      %v3008 = vlog2.pop %v2945
      %v3009 = vmul.f32 %v3008, 0.6931472
      %v3010 = vlog2.pop %v2947
      %v3011 = vmul.f32 %v3010, 0.6931472
      %v3012 = vlog2.pop %v2949
      %v3013 = vmul.f32 %v3012, 0.6931472
      %v3014 = vlog2.pop %v2951
      %v3015 = vmul.f32 %v3014, 0.6931472
      %v3016 = vlog2.pop %v2953
      %v3017 = vmul.f32 %v3016, 0.6931472
      %v3018 = vlog2.pop %v2955
      %v3019 = vmul.f32 %v3018, 0.6931472
      %v3020 = vlog2.pop %v2957
      %v3021 = vmul.f32 %v3020, 0.6931472
      %v3022 = vlog2.pop %v2959
      %v3023 = vmul.f32 %v3022, 0.6931472
      %v3024 = vlog2.pop %v2961
      %v3025 = vmul.f32 %v3024, 0.6931472
      %v3026 = vlog2.pop %v2963
      %v3027 = vmul.f32 %v3026, 0.6931472
      %v3028 = vlog2.pop %v2965
      %v3029 = vmul.f32 %v3028, 0.6931472
      %v3030 = vlog2.pop %v2967
      %v3031 = vmul.f32 %v3030, 0.6931472
      %v3032 = vlog2.pop %v2969
      %v3033 = vmul.f32 %v3032, 0.6931472
      %v3034 = vlog2.pop %v2971
      %v3035 = vmul.f32 %v3034, 0.6931472
      %v3036 = vlog2.pop %v2973
      %v3037 = vmul.f32 %v3036, 0.6931472
      %v3038 = vlog2.pop %v2975
      %v3039 = vmul.f32 %v3038, 0.6931472
      %v3040 = vlog2.pop %v2977
      %v3041 = vmul.f32 %v3040, 0.6931472
      %v3042 = vlog2.pop %v2979
      %v3043 = vmul.f32 %v3042, 0.6931472
      %v3044 = vlog2.pop %v2981
      %v3045 = vmul.f32 %v3044, 0.6931472
      %v3046 = vsub.f32 %v2822, %v2983
      %v3047 = vsub.f32 %v2823, %v2985
      %v3048 = vsub.f32 %v2824, %v2987
      %v3049 = vsub.f32 %v2825, %v2989
      %v3050 = vsub.f32 %v2826, %v2991
      %v3051 = vsub.f32 %v2827, %v2993
      %v3052 = vsub.f32 %v2828, %v2995
      %v3053 = vsub.f32 %v2829, %v2997
      %v3054 = vsub.f32 %v2830, %v2999
      %v3055 = vsub.f32 %v2831, %v3001
      %v3056 = vsub.f32 %v2832, %v3003
      %v3057 = vsub.f32 %v2833, %v3005
      %v3058 = vsub.f32 %v2834, %v3007
      %v3059 = vsub.f32 %v2835, %v3009
      %v3060 = vsub.f32 %v2836, %v3011
      %v3061 = vsub.f32 %v2837, %v3013
      %v3062 = vsub.f32 %v2838, %v3015
      %v3063 = vsub.f32 %v2839, %v3017
      %v3064 = vsub.f32 %v2840, %v3019
      %v3065 = vsub.f32 %v2841, %v3021
      %v3066 = vsub.f32 %v2842, %v3023
      %v3067 = vsub.f32 %v2843, %v3025
      %v3068 = vsub.f32 %v2844, %v3027
      %v3069 = vsub.f32 %v2845, %v3029
      %v3070 = vsub.f32 %v2846, %v3031
      %v3071 = vsub.f32 %v2847, %v3033
      %v3072 = vsub.f32 %v2848, %v3035
      %v3073 = vsub.f32 %v2849, %v3037
      %v3074 = vsub.f32 %v2850, %v3039
      %v3075 = vsub.f32 %v2851, %v3041
      %v3076 = vsub.f32 %v2852, %v3043
      %v3077 = vsub.f32 %v2853, %v3045
      %3078 = vst [vmem:[%s229] sm:$0xff] %v3046
      %3079 = vst [vmem:[%s229 + $0x8] sm:$0xff] %v3047
      %3080 = vst [vmem:[%s229 + $0x10] sm:$0xff] %v3048
      %3081 = vst [vmem:[%s229 + $0x18] sm:$0xff] %v3049
      %3082 = vst [vmem:[%s229 + $0x20] sm:$0xff] %v3050
      %3083 = vst [vmem:[%s229 + $0x28] sm:$0xff] %v3051
      %3084 = vst [vmem:[%s229 + $0x30] sm:$0xff] %v3052
      %3085 = vst [vmem:[%s229 + $0x38] sm:$0xff] %v3053
      %3086 = vst [vmem:[%s229 + $0x40] sm:$0xff] %v3054
      %3087 = vst [vmem:[%s229 + $0x48] sm:$0xff] %v3055
      %3088 = vst [vmem:[%s229 + $0x50] sm:$0xff] %v3056
      %3089 = vst [vmem:[%s229 + $0x58] sm:$0xff] %v3057
      %3090 = vst [vmem:[%s229 + $0x60] sm:$0xff] %v3058
      %3091 = vst [vmem:[%s229 + $0x68] sm:$0xff] %v3059
      %3092 = vst [vmem:[%s229 + $0x70] sm:$0xff] %v3060
      %3093 = vst [vmem:[%s229 + $0x78] sm:$0xff] %v3061
      %3094 = vst [vmem:[%s229 + $0x80] sm:$0xff] %v3062
      %3095 = vst [vmem:[%s229 + $0x88] sm:$0xff] %v3063
      %3096 = vst [vmem:[%s229 + $0x90] sm:$0xff] %v3064
      %3097 = vst [vmem:[%s229 + $0x98] sm:$0xff] %v3065
      %3098 = vst [vmem:[%s229 + $0xa0] sm:$0xff] %v3066
      %3099 = vst [vmem:[%s229 + $0xa8] sm:$0xff] %v3067
      %3100 = vst [vmem:[%s229 + $0xb0] sm:$0xff] %v3068
      %3101 = vst [vmem:[%s229 + $0xb8] sm:$0xff] %v3069
      %3102 = vst [vmem:[%s229 + $0xc0] sm:$0xff] %v3070
      %3103 = vst [vmem:[%s229 + $0xc8] sm:$0xff] %v3071
      %3104 = vst [vmem:[%s229 + $0xd0] sm:$0xff] %v3072
      %3105 = vst [vmem:[%s229 + $0xd8] sm:$0xff] %v3073
      %3106 = vst [vmem:[%s229 + $0xe0] sm:$0xff] %v3074
      %3107 = vst [vmem:[%s229 + $0xe8] sm:$0xff] %v3075
      %3108 = vst [vmem:[%s229 + $0xf0] sm:$0xff] %v3076
      %3109 = vst [vmem:[%s229 + $0xf8] sm:$0xff] %v3077
      %s3110 = smul.u32 32, %s16
      %p3111 = scmp.lt.s32.totalorder %s3110, 63
      %s3112 = scalar_select %p3111, %s3110, 63
      %s3113 = smul.addr %s3112, 8
      %s3114 = scalar_lea.vmem %s5, %s3113
      // Predicated region
      $region41: #{network_forward.1} parent=39 // pred_check
        %p3115 = pneg %p144
      $region42: #{network_forward.1} parent=39 // pred_check_branch
        %3117 = sbr.rel (%p3115) target = $region44
      $region43: #{network_forward.1} parent=39 // pred_region
        %s3118 = smul.u32 32, %s16
      $region44: #{network_forward.1} parent=39 // pred_fallthru
        _
    $region40: #{network_forward.1} parent=5 // pred_fallthru
      _
    %p3119 = scmp.le.s32.totalorder 2, %s11
    // Predicated region
    $region45: #{network_forward.1} parent=5 // pred_check
      %p3120 = pneg %p3119
    $region46: #{network_forward.1} parent=5 // pred_check_branch
      %3122 = sbr.rel (%p3120) target = $region48
    $region47: #{network_forward.1} parent=5 // pred_region
      %s3123 = ssub.s32 %s11, 2
      // Predicated region
      $region49: #{network_forward.1} parent=47 // pred_check
        %p3124 = pneg %p150
      $region50: #{network_forward.1} parent=47 // pred_check_branch
        %3126 = sbr.rel (%p3124) target = $region52
      $region51: #{network_forward.1} parent=47 // pred_region
        %s3127 = smul.u32 32, %s17
        %p3128 = scmp.lt.s32.totalorder %s3127, 63
        %s3129 = scalar_select %p3128, %s3127, 63
        %s3130 = smul.addr %s3129, 8
        %s3131 = scalar_lea.vmem %s5, %s3130
      $region52: #{network_forward.1} parent=47 // pred_fallthru
        _
    $region48: #{network_forward.1} parent=5 // pred_fallthru
      _
  $region6: #{network_forward.1} parent=0 // loop_footer
    %s15 = sadd.s32 1, %s11
  $region7: #{network_forward.1} parent=0 // loop_footer_branch
    %10 = sbr.rel target = $region3
  $region8: #{network_forward.1} parent=0 // loop_exit
    _

</llo_original>
